<compile_context>
chip_gen: v7x
topology: tpu7x:2x2x1
jax: 0.10.0
libtpu: 0.0.40
codegen_flags: <defaults>
</compile_context>

<pallas_src>
import jax
import jax.numpy as jnp
from jax.experimental import pallas as pl
from jax.experimental.pallas import tpu as pltpu


def fused_forecast_kernel(x_ref, m_ref, w_ref, b_ref, out_ref):
    """One grid step: normalize the whole context, matmul against one lane
    tile of the forecast-head weight, de-normalize, store.

    x_ref, m_ref : (D, B, T)       raw context / validity mask (f32)
    w_ref        : (D, D, T, tn)   head weight tile, bf16  [d_out, d_in, t, n]
    b_ref        : (D, 1, tn)      head bias tile, f32
    out_ref      : (D, B, tn)      forecast tile, f32
    """
    D, B, T = x_ref.shape

    x = x_ref[...]
    m = m_ref[...]

    # Masked per-(d, b) instance normalization (all-masked rows fall back to
    # loc=0, scale=sqrt(eps), matching the previous reference behavior).
    cnt = jnp.sum(m, axis=-1, keepdims=True)                 # (D, B, 1)
    denom = jnp.maximum(cnt, 1.0)
    loc = jnp.sum(x * m, axis=-1, keepdims=True) / denom     # (D, B, 1)
    ctr = (x - loc) * m                                      # centered, masked
    var = jnp.sum(ctr * ctr, axis=-1, keepdims=True) / denom
    scale = jnp.sqrt(var + 1e-5)                             # (D, B, 1)
    inv = pl.reciprocal(scale, approx=True)                  # EUP slot, ~free
    xn = (ctr * inv).astype(jnp.bfloat16)                    # (D, B, T)

    # Full-context linear head, per output series d_out:
    #   y[d_out, b, n] = sum_{d_in, t} xn[d_in, b, t] * w[d_out, d_in, t, n]
    # then de-normalize with the per-(d_out, b) scalars (lane broadcast).
    for d_out in range(D):
        acc = None
        for d_in in range(D):
            contrib = jnp.dot(xn[d_in], w_ref[d_out, d_in],
                              preferred_element_type=jnp.float32)
            acc = contrib if acc is None else acc + contrib
        y = acc + b_ref[d_out]                               # (B, tn)
        y = y * scale[d_out] + loc[d_out]                    # de-normalize
        out_ref[d_out] = y.astype(out_ref.dtype)


def emotion_forecast_forward(past_target, past_observed_target, past_is_pad,
                             w, b, *, num_samples, prediction_length):
    """Returns (forecasts [B, S, P, D], flattened [B, S*P*D]) like the module."""
    B, T, D = past_target.shape
    S, P = num_samples, prediction_length
    SP = S * P

    # Validity mask: observed and not padded.
    obs = past_observed_target.astype(jnp.float32)           # (B, T, D)
    pad = past_is_pad.astype(jnp.float32)                    # (B, T)
    mask = obs * (1.0 - pad[:, :, None])                     # (B, T, D)

    # (d, b) on rows, time on lanes.
    x_dbt = jnp.transpose(past_target.astype(jnp.float32), (2, 0, 1))  # (D,B,T)
    m_dbt = jnp.transpose(mask, (2, 0, 1))                             # (D,B,T)

    # Lane tile over the sample*time axis: multiple of 128, capped at 512.
    # (Halve the cap / set vmem_limit_bytes for very large D*T on v7x's 64 MiB.)
    if SP >= 512:
        tn = 512
    else:
        tn = pl.cdiv(SP, 128) * 128
    SP_pad = pl.cdiv(SP, tn) * tn
    n_tiles = SP_pad // tn

    # Surrogate head params, streamed in bf16 (accumulation stays f32 in-kernel).
    w_bf = w.astype(jnp.bfloat16)                            # (D, D, T, SP)
    b_f = b.reshape(D, 1, SP).astype(jnp.float32)
    if SP_pad != SP:
        w_bf = jnp.pad(w_bf, ((0, 0), (0, 0), (0, 0), (0, SP_pad - SP)))
        b_f = jnp.pad(b_f, ((0, 0), (0, 0), (0, SP_pad - SP)))

    out = pl.pallas_call(
        fused_forecast_kernel,
        out_shape=jax.ShapeDtypeStruct((D, B, SP_pad), jnp.float32),
        grid_spec=pltpu.PrefetchScalarGridSpec(
            num_scalar_prefetch=0,
            grid=(n_tiles,),
            in_specs=[
                pl.BlockSpec((D, B, T), lambda j: (0, 0, 0)),         # context
                pl.BlockSpec((D, B, T), lambda j: (0, 0, 0)),         # mask
                pl.BlockSpec((D, D, T, tn), lambda j: (0, 0, 0, j)),  # weight tile
                pl.BlockSpec((D, 1, tn), lambda j: (0, 0, j)),        # bias tile
            ],
            out_specs=pl.BlockSpec((D, B, tn), lambda j: (0, 0, j)),
        ),
        compiler_params=pltpu.CompilerParams(
            dimension_semantics=("parallel",)),
    )(x_dbt, m_dbt, w_bf, b_f)

    out = out[:, :, :SP]                                     # strip lane padding
    forecasts = jnp.transpose(out.reshape(D, B, S, P), (1, 2, 3, 0))  # (B,S,P,D)
    flattened = forecasts.reshape(B, -1)
    return forecasts, flattened


if __name__ == "__main__":
    # Small shapes consistent with the module's forward signature.
    B = 2       # batch
    T = 128     # context_length (lane-dense time axis)
    D = 2       # target_dim
    P = 8       # prediction_length
    S = 100     # num_samples (module default)

    key = jax.random.PRNGKey(0)
    k_x, k_w, k_b = jax.random.split(key, 3)

    past_target = jax.random.normal(k_x, (B, T, D), dtype=jnp.float32)
    past_observed_target = jnp.ones((B, T, D), dtype=bool)
    # a few padded leading steps on the second batch element
    past_is_pad = jnp.zeros((B, T), dtype=bool).at[1, :4].set(True)

    SP = S * P
    # Surrogate forecast-head parameters in an explicit
    # [d_out, d_in, t, sample*time] layout (no hidden flatten convention).
    w = jax.random.normal(k_w, (D, D, T, SP), dtype=jnp.float32) / jnp.sqrt(
        jnp.float32(D * T))
    b = jax.random.normal(k_b, (D, SP), dtype=jnp.float32) * 0.01

    forecasts, flattened = emotion_forecast_forward(
        past_target, past_observed_target, past_is_pad, w, b,
        num_samples=S, prediction_length=P)
    jax.block_until_ready((forecasts, flattened))

    assert forecasts.shape == (B, S, P, D), forecasts.shape
    assert flattened.shape == (B, S * P * D), flattened.shape
    assert bool(jnp.all(jnp.isfinite(forecasts)))
    assert bool(jnp.all(forecasts.reshape(B, -1) == flattened))
    print("KERNEL_OK")
</pallas_src>

<mosaic_0001>
module attributes {stable_mosaic.version = 11 : i64} {
  func.func @fused_forecast_kernel(%arg0: i32, %arg1: memref<2x2x128xf32, #tpu.memory_space<vmem>>, %arg2: memref<2x2x128xf32, #tpu.memory_space<vmem>>, %arg3: memref<2x2x128x512xbf16, #tpu.memory_space<vmem>>, %arg4: memref<2x1x512xf32, #tpu.memory_space<vmem>>, %arg5: memref<2x2x512xf32, #tpu.memory_space<vmem>>) attributes {dimension_semantics = [#tpu.dimension_semantics<parallel>], iteration_bounds = array<i64: 2>, scalar_prefetch = 0 : i64, scratch_operands = 0 : i64, tpu.core_type = #tpu.core_type<tc>, window_params = [{pipeline_mode = #tpu.pipeline_mode<synchronous>, transform_indices = @transform_0, window_bounds = array<i64: 2, 2, 128>}, {pipeline_mode = #tpu.pipeline_mode<synchronous>, transform_indices = @transform_1, window_bounds = array<i64: 2, 2, 128>}, {transform_indices = @transform_2, window_bounds = array<i64: 2, 2, 128, 512>}, {transform_indices = @transform_3, window_bounds = array<i64: 2, 1, 512>}, {transform_indices = @transform_4, window_bounds = array<i64: 2, 2, 512>}]} {
    %c0 = arith.constant 0 : index
    %c0_0 = arith.constant 0 : index
    %c0_1 = arith.constant 0 : index
    %0 = vector.load %arg1[%c0, %c0_0, %c0_1] : memref<2x2x128xf32, #tpu.memory_space<vmem>>, vector<2x2x128xf32>
    %c0_2 = arith.constant 0 : index
    %c0_3 = arith.constant 0 : index
    %c0_4 = arith.constant 0 : index
    %1 = vector.load %arg2[%c0_2, %c0_3, %c0_4] : memref<2x2x128xf32, #tpu.memory_space<vmem>>, vector<2x2x128xf32>
    %cst = arith.constant dense<0.000000e+00> : vector<2x2xf32>
    %2 = vector.multi_reduction <add>, %1, %cst [2] : vector<2x2x128xf32> to vector<2x2xf32>
    %3 = vector.shape_cast %2 : vector<2x2xf32> to vector<2x2x1xf32>
    %cst_5 = arith.constant 1.000000e+00 : f32
    %4 = vector.broadcast %cst_5 : f32 to vector<2x2x1xf32>
    %5 = arith.maximumf %3, %4 : vector<2x2x1xf32>
    %6 = arith.mulf %0, %1 : vector<2x2x128xf32>
    %cst_6 = arith.constant dense<0.000000e+00> : vector<2x2xf32>
    %7 = vector.multi_reduction <add>, %6, %cst_6 [2] : vector<2x2x128xf32> to vector<2x2xf32>
    %8 = vector.shape_cast %7 : vector<2x2xf32> to vector<2x2x1xf32>
    %9 = arith.divf %8, %5 : vector<2x2x1xf32>
    %10 = vector.broadcast %9 : vector<2x2x1xf32> to vector<2x2x128xf32>
    %11 = arith.subf %0, %10 : vector<2x2x128xf32>
    %12 = arith.mulf %11, %1 : vector<2x2x128xf32>
    %13 = arith.mulf %12, %12 : vector<2x2x128xf32>
    %cst_7 = arith.constant dense<0.000000e+00> : vector<2x2xf32>
    %14 = vector.multi_reduction <add>, %13, %cst_7 [2] : vector<2x2x128xf32> to vector<2x2xf32>
    %15 = vector.shape_cast %14 : vector<2x2xf32> to vector<2x2x1xf32>
    %16 = arith.divf %15, %5 : vector<2x2x1xf32>
    %cst_8 = arith.constant 9.99999974E-6 : f32
    %17 = vector.broadcast %cst_8 : f32 to vector<2x2x1xf32>
    %18 = arith.addf %16, %17 : vector<2x2x1xf32>
    %19 = math.sqrt %18 : vector<2x2x1xf32>
    %20 = tpu.reciprocal %19 {approx = true} : vector<2x2x1xf32> -> vector<2x2x1xf32>
    %21 = vector.broadcast %20 : vector<2x2x1xf32> to vector<2x2x128xf32>
    %22 = arith.mulf %12, %21 : vector<2x2x128xf32>
    %23 = arith.truncf %22 : vector<2x2x128xf32> to vector<2x2x128xbf16>
    %24 = vector.extract_strided_slice %23 {offsets = [0, 0, 0], sizes = [1, 2, 128], strides = [1, 1, 1]} : vector<2x2x128xbf16> to vector<1x2x128xbf16>
    %25 = vector.shape_cast %24 : vector<1x2x128xbf16> to vector<2x128xbf16>
    %c0_9 = arith.constant 0 : index
    %c0_10 = arith.constant 0 : index
    %c0_11 = arith.constant 0 : index
    %c0_12 = arith.constant 0 : index
    %26 = vector.load %arg3[%c0_9, %c0_10, %c0_11, %c0_12] : memref<2x2x128x512xbf16, #tpu.memory_space<vmem>>, vector<1x1x128x512xbf16>
    %27 = vector.shape_cast %26 : vector<1x1x128x512xbf16> to vector<128x512xbf16>
    %cst_13 = arith.constant dense<0.000000e+00> : vector<2x512xf32>
    %28 = tpu.matmul %25, %27, %cst_13 {dimension_numbers = #tpu.dot_dimension_numbers<[1], [0], [0], [1], [0, 0, 1, 1], [], []>} : vector<2x128xbf16>, vector<128x512xbf16>, vector<2x512xf32> -> vector<2x512xf32>
    %29 = vector.extract_strided_slice %23 {offsets = [1, 0, 0], sizes = [1, 2, 128], strides = [1, 1, 1]} : vector<2x2x128xbf16> to vector<1x2x128xbf16>
    %30 = vector.shape_cast %29 : vector<1x2x128xbf16> to vector<2x128xbf16>
    %c0_14 = arith.constant 0 : index
    %c1 = arith.constant 1 : index
    %c0_15 = arith.constant 0 : index
    %c0_16 = arith.constant 0 : index
    %31 = vector.load %arg3[%c0_14, %c1, %c0_15, %c0_16] : memref<2x2x128x512xbf16, #tpu.memory_space<vmem>>, vector<1x1x128x512xbf16>
    %32 = vector.shape_cast %31 : vector<1x1x128x512xbf16> to vector<128x512xbf16>
    %cst_17 = arith.constant dense<0.000000e+00> : vector<2x512xf32>
    %33 = tpu.matmul %30, %32, %cst_17 {dimension_numbers = #tpu.dot_dimension_numbers<[1], [0], [0], [1], [0, 0, 1, 1], [], []>} : vector<2x128xbf16>, vector<128x512xbf16>, vector<2x512xf32> -> vector<2x512xf32>
    %34 = arith.addf %28, %33 : vector<2x512xf32>
    %c0_18 = arith.constant 0 : index
    %c0_19 = arith.constant 0 : index
    %c0_20 = arith.constant 0 : index
    %35 = vector.load %arg4[%c0_18, %c0_19, %c0_20] : memref<2x1x512xf32, #tpu.memory_space<vmem>>, vector<1x1x512xf32>
    %36 = vector.shape_cast %35 : vector<1x1x512xf32> to vector<1x512xf32>
    %37 = vector.broadcast %36 : vector<1x512xf32> to vector<2x512xf32>
    %38 = arith.addf %34, %37 : vector<2x512xf32>
    %39 = vector.extract_strided_slice %19 {offsets = [0, 0, 0], sizes = [1, 2, 1], strides = [1, 1, 1]} : vector<2x2x1xf32> to vector<1x2x1xf32>
    %40 = vector.shape_cast %39 : vector<1x2x1xf32> to vector<2x1xf32>
    %41 = vector.broadcast %40 : vector<2x1xf32> to vector<2x512xf32>
    %42 = arith.mulf %38, %41 : vector<2x512xf32>
    %43 = vector.extract_strided_slice %9 {offsets = [0, 0, 0], sizes = [1, 2, 1], strides = [1, 1, 1]} : vector<2x2x1xf32> to vector<1x2x1xf32>
    %44 = vector.shape_cast %43 : vector<1x2x1xf32> to vector<2x1xf32>
    %45 = vector.broadcast %44 : vector<2x1xf32> to vector<2x512xf32>
    %46 = arith.addf %42, %45 : vector<2x512xf32>
    %c0_21 = arith.constant 0 : index
    %c0_22 = arith.constant 0 : index
    %c0_23 = arith.constant 0 : index
    %47 = vector.load %arg5[%c0_21, %c0_22, %c0_23] : memref<2x2x512xf32, #tpu.memory_space<vmem>>, vector<1x2x512xf32>
    %48 = vector.shape_cast %47 : vector<1x2x512xf32> to vector<2x512xf32>
    %49 = vector.shape_cast %46 : vector<2x512xf32> to vector<1x2x512xf32>
    tpu.vector_store %arg5[%c0_21, %c0_22, %c0_23], %49 {strides = array<i32>} : memref<2x2x512xf32, #tpu.memory_space<vmem>>, vector<1x2x512xf32>,
    %50 = vector.extract_strided_slice %23 {offsets = [0, 0, 0], sizes = [1, 2, 128], strides = [1, 1, 1]} : vector<2x2x128xbf16> to vector<1x2x128xbf16>
    %51 = vector.shape_cast %50 : vector<1x2x128xbf16> to vector<2x128xbf16>
    %c1_24 = arith.constant 1 : index
    %c0_25 = arith.constant 0 : index
    %c0_26 = arith.constant 0 : index
    %c0_27 = arith.constant 0 : index
    %52 = vector.load %arg3[%c1_24, %c0_25, %c0_26, %c0_27] : memref<2x2x128x512xbf16, #tpu.memory_space<vmem>>, vector<1x1x128x512xbf16>
    %53 = vector.shape_cast %52 : vector<1x1x128x512xbf16> to vector<128x512xbf16>
    %cst_28 = arith.constant dense<0.000000e+00> : vector<2x512xf32>
    %54 = tpu.matmul %51, %53, %cst_28 {dimension_numbers = #tpu.dot_dimension_numbers<[1], [0], [0], [1], [0, 0, 1, 1], [], []>} : vector<2x128xbf16>, vector<128x512xbf16>, vector<2x512xf32> -> vector<2x512xf32>
    %55 = vector.extract_strided_slice %23 {offsets = [1, 0, 0], sizes = [1, 2, 128], strides = [1, 1, 1]} : vector<2x2x128xbf16> to vector<1x2x128xbf16>
    %56 = vector.shape_cast %55 : vector<1x2x128xbf16> to vector<2x128xbf16>
    %c1_29 = arith.constant 1 : index
    %c1_30 = arith.constant 1 : index
    %c0_31 = arith.constant 0 : index
    %c0_32 = arith.constant 0 : index
    %57 = vector.load %arg3[%c1_29, %c1_30, %c0_31, %c0_32] : memref<2x2x128x512xbf16, #tpu.memory_space<vmem>>, vector<1x1x128x512xbf16>
    %58 = vector.shape_cast %57 : vector<1x1x128x512xbf16> to vector<128x512xbf16>
    %cst_33 = arith.constant dense<0.000000e+00> : vector<2x512xf32>
    %59 = tpu.matmul %56, %58, %cst_33 {dimension_numbers = #tpu.dot_dimension_numbers<[1], [0], [0], [1], [0, 0, 1, 1], [], []>} : vector<2x128xbf16>, vector<128x512xbf16>, vector<2x512xf32> -> vector<2x512xf32>
    %60 = arith.addf %54, %59 : vector<2x512xf32>
    %c1_34 = arith.constant 1 : index
    %c0_35 = arith.constant 0 : index
    %c0_36 = arith.constant 0 : index
    %61 = vector.load %arg4[%c1_34, %c0_35, %c0_36] : memref<2x1x512xf32, #tpu.memory_space<vmem>>, vector<1x1x512xf32>
    %62 = vector.shape_cast %61 : vector<1x1x512xf32> to vector<1x512xf32>
    %63 = vector.broadcast %62 : vector<1x512xf32> to vector<2x512xf32>
    %64 = arith.addf %60, %63 : vector<2x512xf32>
    %65 = vector.extract_strided_slice %19 {offsets = [1, 0, 0], sizes = [1, 2, 1], strides = [1, 1, 1]} : vector<2x2x1xf32> to vector<1x2x1xf32>
    %66 = vector.shape_cast %65 : vector<1x2x1xf32> to vector<2x1xf32>
    %67 = vector.broadcast %66 : vector<2x1xf32> to vector<2x512xf32>
    %68 = arith.mulf %64, %67 : vector<2x512xf32>
    %69 = vector.extract_strided_slice %9 {offsets = [1, 0, 0], sizes = [1, 2, 1], strides = [1, 1, 1]} : vector<2x2x1xf32> to vector<1x2x1xf32>
    %70 = vector.shape_cast %69 : vector<1x2x1xf32> to vector<2x1xf32>
    %71 = vector.broadcast %70 : vector<2x1xf32> to vector<2x512xf32>
    %72 = arith.addf %68, %71 : vector<2x512xf32>
    %c1_37 = arith.constant 1 : index
    %c0_38 = arith.constant 0 : index
    %c0_39 = arith.constant 0 : index
    %73 = vector.load %arg5[%c1_37, %c0_38, %c0_39] : memref<2x2x512xf32, #tpu.memory_space<vmem>>, vector<1x2x512xf32>
    %74 = vector.shape_cast %73 : vector<1x2x512xf32> to vector<2x512xf32>
    %75 = vector.shape_cast %72 : vector<2x512xf32> to vector<1x2x512xf32>
    tpu.vector_store %arg5[%c1_37, %c0_38, %c0_39], %75 {strides = array<i32>} : memref<2x2x512xf32, #tpu.memory_space<vmem>>, vector<1x2x512xf32>,
    return
  }
  func.func @transform_0(%arg0: i32) -> (i32, i32, i32) {
    %c0_i32 = arith.constant 0 : i32
    %c0_i32_0 = arith.constant 0 : i32
    %c0_i32_1 = arith.constant 0 : i32
    %c0_i32_2 = arith.constant 0 : i32
    return %c0_i32, %c0_i32_0, %c0_i32_1 : i32, i32, i32
  }
  func.func @transform_1(%arg0: i32) -> (i32, i32, i32) {
    %c0_i32 = arith.constant 0 : i32
    %c0_i32_0 = arith.constant 0 : i32
    %c0_i32_1 = arith.constant 0 : i32
    %c0_i32_2 = arith.constant 0 : i32
    return %c0_i32, %c0_i32_0, %c0_i32_1 : i32, i32, i32
  }
  func.func @transform_2(%arg0: i32) -> (i32, i32, i32, i32) {
    %c0_i32 = arith.constant 0 : i32
    %c0_i32_0 = arith.constant 0 : i32
    %c0_i32_1 = arith.constant 0 : i32
    %c0_i32_2 = arith.constant 0 : i32
    return %c0_i32, %c0_i32_0, %c0_i32_1, %arg0 : i32, i32, i32, i32
  }
  func.func @transform_3(%arg0: i32) -> (i32, i32, i32) {
    %c0_i32 = arith.constant 0 : i32
    %c0_i32_0 = arith.constant 0 : i32
    %c0_i32_1 = arith.constant 0 : i32
    return %c0_i32, %c0_i32_0, %arg0 : i32, i32, i32
  }
  func.func @transform_4(%arg0: i32) -> (i32, i32, i32) {
    %c0_i32 = arith.constant 0 : i32
    %c0_i32_0 = arith.constant 0 : i32
    %c0_i32_1 = arith.constant 0 : i32
    return %c0_i32, %c0_i32_0, %arg0 : i32, i32, i32
  }
}

</mosaic_0001>

<llo_original>
// kernel: tpu_custom_call.1
$region0: #{tpu_custom_call.1}
  #allocation0 [shape = 'u32[]', space=smem, size = 0x4, offset = 0x4, fixed_abs, tag = 'smem constant byte address 0x4 - core index']
  #allocation1 [shape = 'u32[144,128]{1,0:T(1,128)}', space=vmem, size = 0x12000, scoped, tag = 'internal scratch']
  %s0 = inlined_call_operand.hbm [shape: f32[2,2,128], index: 0, kind: input, shape index: {}]
  %s1 = inlined_call_operand.hbm [shape: f32[2,2,128], index: 1, kind: input, shape index: {}]
  %s2 = inlined_call_operand.hbm [shape: bf16[2,2,128,1024], index: 2, kind: input, shape index: {}]
  %s3 = inlined_call_operand.hbm [shape: f32[2,1,1024], index: 3, kind: input, shape index: {}]
  %s4 = inlined_call_operand.hbm [shape: f32[2,2,1024], index: 4, kind: output, shape index: {}]
  %s5 = sld [smem:[#allocation0]]
  $region65: #{tpu_custom_call.1} parent=0
    _
  %s7 = ssub.s32 1, %s5
  %s8 = scalar_select 0, %s7, %s5
  $region1: #{tpu_custom_call.1} parent=0
    #allocation2 [shape = 'u8[2048]{0}', space=vmem, size = 0x800, scoped, tag = 'input window, operand 0, single buffered']
    #allocation3 [shape = 's32[2]{0}', space=sflag, size = 0x8, scoped, tag = 'scoped memory for tpu_custom_call.1']
    #allocation4 [shape = 's32[2]{0}', space=sflag, size = 0x8, scoped, tag = 'scoped memory for tpu_custom_call.1']
    #allocation5 [shape = 'u8[2048]{0}', space=vmem, size = 0x800, scoped, tag = 'input window, operand 1, single buffered']
    #allocation6 [shape = 's32[1]{0}', space=sflag, size = 0x4, scoped, tag = 'scoped memory for tpu_custom_call.1']
    #allocation7 [shape = 'u8[1048576]{0}', space=vmem, size = 0x100000, scoped, tag = 'input window, operand 2']
    #allocation8 [shape = 'u8[8192]{0}', space=vmem, size = 0x2000, scoped, tag = 'input window, operand 3']
    #allocation9 [shape = 'u8[16384]{0}', space=vmem, size = 0x4000, scoped, tag = 'output window, operand 0']
    %9 = vsyncpa [#allocation3], 0
    %10 = vsyncpa [#allocation6], 0
    %11 = vsyncpa [#allocation4], 0
    %s12 = scalar_lea.sflag [#allocation4], 1
    %13 = vsyncpa %s12, 0
    loop: start=0, step=1, limit=4
    $region2: #{tpu_custom_call.1} parent=1 // loop_pre_header
      _
    $region3: #{tpu_custom_call.1} parent=1 // loop_header
      %s15 = sphi 0, %s19
      %p16 = scmp.ge.s32.totalorder %s15, 4
      %s23 = sphi 0, %s23
      %s25 = sphi 0, %s23
      %s26 = sphi 0, %s25
      %s40 = sphi 0, %s26
      %s44 = sphi 0, %s44
      %s46 = sphi 0, %s44
      %s47 = sphi 0, %s46
      %s61 = sphi 0, %s47
      %s67 = sphi 0, %s69
      %s70 = sphi 0, %s67
      %s71 = sphi 0, %s70
      %s87 = sphi 0, %s71
      %s93 = sphi 0, %s95
      %s96 = sphi 0, %s93
      %s97 = sphi 0, %s96
      %s113 = sphi 0, %s97
      %s119 = sphi 0, %s121
      %s122 = sphi 0, %s119
      %s123 = sphi 0, %s122
      %s139 = sphi 0, %s123
    $region4: #{tpu_custom_call.1} parent=1 // loop_header_branch
      %18 = sbr.rel (%p16) target = $region8
    $region5: #{tpu_custom_call.1} parent=1 // loop_body
      %s20 = ssub.s32 %s15, 1
      %s21 = ssub.s32 %s15, 2
      %s22 = sadd.s32 %s15, 1
      %s24 = sadd.s32 %s23, 1
      %p27 = scmp.eq.s32.totalorder %s15, 1
      %p28 = scmp.ne.s32.totalorder %s23, %s25
      %p29 = scmp.eq.s32.totalorder %s15, 0
      %p30 = por %p28, %p29
      %p31 = scmp.ne.s32.totalorder %s23, %s25
      %p32 = scmp.eq.s32.totalorder %s20, 1
      %p33 = por %p31, %p32
      %p34 = scmp.ne.s32.totalorder %s25, %s26
      %p35 = scmp.eq.s32.totalorder %s20, 0
      %p36 = por %p34, %p35
      %p37 = scmp.ne.s32.totalorder %s25, %s26
      %p38 = scmp.eq.s32.totalorder %s21, 1
      %p39 = por %p37, %p38
      %p41 = scmp.ne.s32.totalorder %s26, %s40
      %p42 = scmp.eq.s32.totalorder %s21, 0
      %p43 = por %p41, %p42
      %s45 = sadd.s32 %s44, 1
      %p48 = scmp.eq.s32.totalorder %s15, 1
      %p49 = scmp.ne.s32.totalorder %s44, %s46
      %p50 = scmp.eq.s32.totalorder %s15, 0
      %p51 = por %p49, %p50
      %p52 = scmp.ne.s32.totalorder %s44, %s46
      %p53 = scmp.eq.s32.totalorder %s20, 1
      %p54 = por %p52, %p53
      %p55 = scmp.ne.s32.totalorder %s46, %s47
      %p56 = scmp.eq.s32.totalorder %s20, 0
      %p57 = por %p55, %p56
      %p58 = scmp.ne.s32.totalorder %s46, %s47
      %p59 = scmp.eq.s32.totalorder %s21, 1
      %p60 = por %p58, %p59
      %p62 = scmp.ne.s32.totalorder %s47, %s61
      %p63 = scmp.eq.s32.totalorder %s21, 0
      %p64 = por %p62, %p63
      %s65 = ssub.s32 %s15, %s22
      %p66 = scmp.eq.s32.totalorder %s65, 0
      %s68 = sadd.s32 %s67, 1
      %s69 = scalar_select %p66, %s67, %s68
      %p72 = pneg %p66
      %p73 = scmp.eq.s32.totalorder %s15, 1
      %p74 = por %p72, %p73
      %p75 = scmp.ne.s32.totalorder %s67, %s70
      %p76 = scmp.eq.s32.totalorder %s15, 0
      %p77 = por %p75, %p76
      %p78 = scmp.ne.s32.totalorder %s67, %s70
      %p79 = scmp.eq.s32.totalorder %s20, 1
      %p80 = por %p78, %p79
      %p81 = scmp.ne.s32.totalorder %s70, %s71
      %p82 = scmp.eq.s32.totalorder %s20, 0
      %p83 = por %p81, %p82
      %p84 = scmp.ne.s32.totalorder %s70, %s71
      %p85 = scmp.eq.s32.totalorder %s21, 1
      %p86 = por %p84, %p85
      %p88 = scmp.ne.s32.totalorder %s71, %s87
      %p89 = scmp.eq.s32.totalorder %s21, 0
      %p90 = por %p88, %p89
      %s91 = ssub.s32 %s15, %s22
      %p92 = scmp.eq.s32.totalorder %s91, 0
      %s94 = sadd.s32 %s93, 1
      %s95 = scalar_select %p92, %s93, %s94
      %p98 = pneg %p92
      %p99 = scmp.eq.s32.totalorder %s15, 1
      %p100 = por %p98, %p99
      %p101 = scmp.ne.s32.totalorder %s93, %s96
      %p102 = scmp.eq.s32.totalorder %s15, 0
      %p103 = por %p101, %p102
      %p104 = scmp.ne.s32.totalorder %s93, %s96
      %p105 = scmp.eq.s32.totalorder %s20, 1
      %p106 = por %p104, %p105
      %p107 = scmp.ne.s32.totalorder %s96, %s97
      %p108 = scmp.eq.s32.totalorder %s20, 0
      %p109 = por %p107, %p108
      %p110 = scmp.ne.s32.totalorder %s96, %s97
      %p111 = scmp.eq.s32.totalorder %s21, 1
      %p112 = por %p110, %p111
      %p114 = scmp.ne.s32.totalorder %s97, %s113
      %p115 = scmp.eq.s32.totalorder %s21, 0
      %p116 = por %p114, %p115
      %s117 = ssub.s32 %s15, %s22
      %p118 = scmp.eq.s32.totalorder %s117, 0
      %s120 = sadd.s32 %s119, 1
      %s121 = scalar_select %p118, %s119, %s120
      %p124 = pneg %p118
      %p125 = scmp.eq.s32.totalorder %s15, 1
      %p126 = por %p124, %p125
      %p127 = scmp.ne.s32.totalorder %s119, %s122
      %p128 = scmp.eq.s32.totalorder %s15, 0
      %p129 = por %p127, %p128
      %p130 = scmp.ne.s32.totalorder %s119, %s122
      %p131 = scmp.eq.s32.totalorder %s20, 1
      %p132 = por %p130, %p131
      %p133 = scmp.ne.s32.totalorder %s122, %s123
      %p134 = scmp.eq.s32.totalorder %s20, 0
      %p135 = por %p133, %p134
      %p136 = scmp.ne.s32.totalorder %s122, %s123
      %p137 = scmp.eq.s32.totalorder %s21, 1
      %p138 = por %p136, %p137
      %p140 = scmp.ne.s32.totalorder %s123, %s139
      %p141 = scmp.eq.s32.totalorder %s21, 0
      %p142 = por %p140, %p141
      %p143 = scmp.le.s32.totalorder 1, %s15
      %p144 = scmp.lt.s32.totalorder %s15, 3
      %p145 = pnand %p143, %p144
      %p146 = pneg %p145
      // Predicated region
      $region9: #{tpu_custom_call.1} parent=5 // pred_check
        _
      $region10: #{tpu_custom_call.1} parent=5 // pred_check_branch
        %148 = sbr.rel (%p145) target = $region12
      $region11: #{tpu_custom_call.1} parent=5 // pred_region
        %s149 = ssub.s32 %s15, 1
        // Predicated region
        $region13: #{tpu_custom_call.1} parent=11 // pred_check
          %p150 = pneg %p36
        $region14: #{tpu_custom_call.1} parent=11 // pred_check_branch
          %152 = sbr.rel (%p150) target = $region16
        $region15: #{tpu_custom_call.1} parent=11 // pred_region
          %s154 = ssub.s32 64, 64
          %155 = vsyncadd [#allocation3], %s154
          %s156 = sshll.u32 [#allocation2], 4
          %s157 = int_to_ptr.vmem [resolvable:$true] %s156
          %162 = dma.hbm_to_vmem [thread:$0]  %s0, 64, %s157, [#allocation3], 32, 32, 2
        $region16: #{tpu_custom_call.1} parent=11 // pred_fallthru
          _
        // Predicated region
        $region17: #{tpu_custom_call.1} parent=11 // pred_check
          %p163 = pneg %p57
        $region18: #{tpu_custom_call.1} parent=11 // pred_check_branch
          %165 = sbr.rel (%p163) target = $region20
        $region19: #{tpu_custom_call.1} parent=11 // pred_region
          %s167 = ssub.s32 64, 64
          %168 = vsyncadd [#allocation6], %s167
          %s169 = sshll.u32 [#allocation5], 4
          %s170 = int_to_ptr.vmem [resolvable:$true] %s169
          %175 = dma.hbm_to_vmem [thread:$0]  %s1, 64, %s170, [#allocation6], 32, 32, 2
        $region20: #{tpu_custom_call.1} parent=11 // pred_fallthru
          _
      $region12: #{tpu_custom_call.1} parent=5 // pred_fallthru
        _
      %p176 = scmp.lt.s32.totalorder %s15, 2
      // Predicated region
      $region21: #{tpu_custom_call.1} parent=5 // pred_check
        %p177 = pneg %p176
      $region22: #{tpu_custom_call.1} parent=5 // pred_check_branch
        %179 = sbr.rel (%p177) target = $region24
      $region23: #{tpu_custom_call.1} parent=5 // pred_region
        // Predicated region
        $region25: #{tpu_custom_call.1} parent=23 // pred_check
          %p180 = pneg %p77
        $region26: #{tpu_custom_call.1} parent=23 // pred_check_branch
          %182 = sbr.rel (%p180) target = $region28
        $region27: #{tpu_custom_call.1} parent=23 // pred_region
          %s183 = sand.u32 %s15, 1
          %s184 = scalar_lea.sflag [#allocation3], %s183
          %s185 = sand.u32 %s67, 1
          %s186 = smul.addr %s185, 1024
          %s187 = scalar_lea.vmem [#allocation7], %s186
          %s188 = smul.u32 4, %s15
          %s190 = ssub.s32 16384, 16384
          %191 = vsyncadd %s184, %s190
          %s192 = smul.addr %s188, 64
          %s193 = scalar_lea.hbm %s2, %s192
          %s194 = sshll.u32 %s187, 4
          %s195 = int_to_ptr.vmem [resolvable:$true] %s194
          %200 = dma.hbm_to_vmem [thread:$0]  %s193, 16384, %s195, %s184, 512, 256, 16
        $region28: #{tpu_custom_call.1} parent=23 // pred_fallthru
          _
        // Predicated region
        $region29: #{tpu_custom_call.1} parent=23 // pred_check
          %p201 = pneg %p103
        $region30: #{tpu_custom_call.1} parent=23 // pred_check_branch
          %203 = sbr.rel (%p201) target = $region32
        $region31: #{tpu_custom_call.1} parent=23 // pred_region
          %s204 = sand.u32 %s15, 1
          %s205 = scalar_lea.sflag [#allocation3], %s204
          %s206 = sand.u32 %s93, 1
          %s207 = smul.addr %s206, 8
          %s208 = scalar_lea.vmem [#allocation8], %s207
          %s209 = smul.u32 4, %s15
          %s211 = ssub.s32 128, 128
          %212 = vsyncadd %s205, %s211
          %s213 = smul.addr %s209, 16
          %s214 = scalar_lea.hbm %s3, %s213
          %s215 = sshll.u32 %s208, 4
          %s216 = int_to_ptr.vmem [resolvable:$true] %s215
          %221 = dma.hbm_to_vmem [thread:$0]  %s214, 128, %s216, %s205, 128, 64, 4
        $region32: #{tpu_custom_call.1} parent=23 // pred_fallthru
          _
      $region24: #{tpu_custom_call.1} parent=5 // pred_fallthru
        _
      %p222 = scmp.le.s32.totalorder 1, %s15
      %p223 = scmp.lt.s32.totalorder %s15, 3
      %p224 = pnand %p222, %p223
      %p225 = pneg %p224
      // Predicated region
      $region33: #{tpu_custom_call.1} parent=5 // pred_check
        _
      $region34: #{tpu_custom_call.1} parent=5 // pred_check_branch
        %227 = sbr.rel (%p224) target = $region36
      $region35: #{tpu_custom_call.1} parent=5 // pred_region
        %s228 = ssub.s32 %s15, 1
        // Predicated region
        $region37: #{tpu_custom_call.1} parent=35 // pred_check
          %p229 = pneg %p36
        $region38: #{tpu_custom_call.1} parent=35 // pred_check_branch
          %231 = sbr.rel (%p229) target = $region40
        $region39: #{tpu_custom_call.1} parent=35 // pred_region
          %232 = dma.done [#allocation3], 64
        $region40: #{tpu_custom_call.1} parent=35 // pred_fallthru
          _
        // Predicated region
        $region41: #{tpu_custom_call.1} parent=35 // pred_check
          %p233 = pneg %p57
        $region42: #{tpu_custom_call.1} parent=35 // pred_check_branch
          %235 = sbr.rel (%p233) target = $region44
        $region43: #{tpu_custom_call.1} parent=35 // pred_region
          %236 = dma.done [#allocation6], 64
        $region44: #{tpu_custom_call.1} parent=35 // pred_fallthru
          _
        %s237 = sand.u32 %s20, 1
        %s238 = scalar_lea.sflag [#allocation3], %s237
        %s239 = sand.u32 %s70, 1
        %s240 = smul.addr %s239, 1024
        %s241 = scalar_lea.vmem [#allocation7], %s240
        // Predicated region
        $region45: #{tpu_custom_call.1} parent=35 // pred_check
          %p242 = pneg %p83
        $region46: #{tpu_custom_call.1} parent=35 // pred_check_branch
          %244 = sbr.rel (%p242) target = $region48
        $region47: #{tpu_custom_call.1} parent=35 // pred_region
          %245 = dma.done %s238, 16384
        $region48: #{tpu_custom_call.1} parent=35 // pred_fallthru
          _
        %s246 = sand.u32 %s20, 1
        %s247 = scalar_lea.sflag [#allocation3], %s246
        %s248 = sand.u32 %s96, 1
        %s249 = smul.addr %s248, 8
        %s250 = scalar_lea.vmem [#allocation8], %s249
        // Predicated region
        $region49: #{tpu_custom_call.1} parent=35 // pred_check
          %p251 = pneg %p109
        $region50: #{tpu_custom_call.1} parent=35 // pred_check_branch
          %253 = sbr.rel (%p251) target = $region52
        $region51: #{tpu_custom_call.1} parent=35 // pred_region
          %254 = dma.done %s247, 128
        $region52: #{tpu_custom_call.1} parent=35 // pred_fallthru
          _
        %p255 = pneg %p36
        %p256 = pneg %p33
        %p257 = pneg %p57
        %p258 = pneg %p54
        %s259 = sand.u32 %s20, 1
        %s260 = scalar_lea.sflag [#allocation3], %s259
        %s261 = sand.u32 %s70, 1
        %s262 = smul.addr %s261, 1024
        %s263 = scalar_lea.vmem [#allocation7], %s262
        %p264 = pneg %p83
        %p265 = pneg %p80
        %s266 = sand.u32 %s20, 1
        %s267 = scalar_lea.sflag [#allocation3], %s266
        %s268 = sand.u32 %s96, 1
        %s269 = smul.addr %s268, 8
        %s270 = scalar_lea.vmem [#allocation8], %s269
        %p271 = pneg %p109
        %p272 = pneg %p106
        %p273 = pneg %p135
        %p274 = pneg %p132
        %s275 = sand.u32 %s122, 1
        %s276 = scalar_lea.sflag [#allocation4], %s275
        %s277 = sand.u32 %s122, 1
        %s278 = smul.addr %s277, 16
        %s279 = scalar_lea.vmem [#allocation9], %s278
        %s280 = smul.u32 4, %s20
        %s281 = smul.u32 4, %s20
        %s282 = smul.u32 4, %s20
        %v284 = vld [vmem:[#allocation2] sm:$0x3]
        %v285 = vld [vmem:[#allocation2 + $0x2] sm:$0x3]
        %v286 = vld [vmem:[#allocation5] sm:$0x3]
        %v287 = vld [vmem:[#allocation5 + $0x2] sm:$0x3]
        %vm288 = vcmask 1041408
        %v289 = vsel %vm288, %v286, 0.0
        %290 = vadd.xlane.f32.xlu0 %v289
        %v291 = vpop.xlane.xlu0 %290
        %v292 = vsel %vm288, %v287, 0.0
        %293 = vadd.xlane.f32.xlu0 %v292
        %v294 = vpop.xlane.xlu0 %293
        %v295 = vmax.f32 %v291, 1.0
        %v296 = vmax.f32 %v294, 1.0
        %v297 = vmul.f32 %v284, %v286
        %v298 = vmul.f32 %v285, %v287
        %v299 = vsel %vm288, %v297, 0.0
        %300 = vadd.xlane.f32.xlu0 %v299
        %v301 = vpop.xlane.xlu0 %300
        %v302 = vsel %vm288, %v298, 0.0
        %303 = vadd.xlane.f32.xlu0 %v302
        %v304 = vpop.xlane.xlu0 %303
        %v305 = vrcp.pop %v295
        %v306 = vmul.f32 %v301, %v305
        %v307 = vrcp.pop %v296
        %v308 = vmul.f32 %v304, %v307
        %v309 = vsub.f32 %v284, %v306
        %v310 = vsub.f32 %v285, %v308
        %v311 = vmul.f32 %v309, %v286
        %v312 = vmul.f32 %v310, %v287
        %v313 = vmul.f32 %v311, %v311
        %v314 = vmul.f32 %v312, %v312
        %v315 = vsel %vm288, %v313, 0.0
        %316 = vadd.xlane.f32.xlu0 %v315
        %v317 = vpop.xlane.xlu0 %316
        %v318 = vsel %vm288, %v314, 0.0
        %319 = vadd.xlane.f32.xlu0 %v318
        %v320 = vpop.xlane.xlu0 %319
        %v321 = vmul.f32 %v317, %v305
        %v322 = vmul.f32 %v320, %v307
        %v323 = vadd.f32 %v321, 1e-05
        %v324 = vadd.f32 %v322, 1e-05
        %v325 = vrsqrt.pop %v323
        %v326 = vmul.f32 %v323, %v325
        %vm327 = vcmp.eq.f32.partialorder %v323, inf
        %v328 = vsel %vm327, %v323, %v326
        %vm329 = vcmp.eq.f32.partialorder %v323, 0.0
        %v330 = vand.u32 %v323, 2147483648
        %v331 = vsel %vm329, %v330, %v328
        %v332 = vrsqrt.pop %v324
        %v333 = vmul.f32 %v324, %v332
        %vm334 = vcmp.eq.f32.partialorder %v324, inf
        %v335 = vsel %vm334, %v324, %v333
        %vm336 = vcmp.eq.f32.partialorder %v324, 0.0
        %v337 = vand.u32 %v324, 2147483648
        %v338 = vsel %vm336, %v337, %v335
        %v339 = vrcp.pop %v331
        %v340 = vrcp.pop %v338
        %v341 = vmul.f32 %v311, %v339
        %v342 = vmul.f32 %v312, %v340
        %v343 = vpack.c.bf16 %v341, %v341
        %v344 = vpack.c.bf16 %v342, %v342
        %v345 = vld [vmem:[%s241] sm:$0xff]
        %v346 = vld [vmem:[%s241 + $0x8] sm:$0xff]
        %v347 = vld [vmem:[%s241 + $0x10] sm:$0xff]
        %v348 = vld [vmem:[%s241 + $0x18] sm:$0xff]
        %v349 = vld [vmem:[%s241 + $0x20] sm:$0xff]
        %v350 = vld [vmem:[%s241 + $0x28] sm:$0xff]
        %v351 = vld [vmem:[%s241 + $0x30] sm:$0xff]
        %v352 = vld [vmem:[%s241 + $0x38] sm:$0xff]
        %v353 = vld [vmem:[%s241 + $0x40] sm:$0xff]
        %v354 = vld [vmem:[%s241 + $0x48] sm:$0xff]
        %v355 = vld [vmem:[%s241 + $0x50] sm:$0xff]
        %v356 = vld [vmem:[%s241 + $0x58] sm:$0xff]
        %v357 = vld [vmem:[%s241 + $0x60] sm:$0xff]
        %v358 = vld [vmem:[%s241 + $0x68] sm:$0xff]
        %v359 = vld [vmem:[%s241 + $0x70] sm:$0xff]
        %v360 = vld [vmem:[%s241 + $0x78] sm:$0xff]
        %v361 = vld [vmem:[%s241 + $0x80] sm:$0xff]
        %v362 = vld [vmem:[%s241 + $0x88] sm:$0xff]
        %v363 = vld [vmem:[%s241 + $0x90] sm:$0xff]
        %v364 = vld [vmem:[%s241 + $0x98] sm:$0xff]
        %v365 = vld [vmem:[%s241 + $0xa0] sm:$0xff]
        %v366 = vld [vmem:[%s241 + $0xa8] sm:$0xff]
        %v367 = vld [vmem:[%s241 + $0xb0] sm:$0xff]
        %v368 = vld [vmem:[%s241 + $0xb8] sm:$0xff]
        %v369 = vld [vmem:[%s241 + $0xc0] sm:$0xff]
        %v370 = vld [vmem:[%s241 + $0xc8] sm:$0xff]
        %v371 = vld [vmem:[%s241 + $0xd0] sm:$0xff]
        %v372 = vld [vmem:[%s241 + $0xd8] sm:$0xff]
        %v373 = vld [vmem:[%s241 + $0xe0] sm:$0xff]
        %v374 = vld [vmem:[%s241 + $0xe8] sm:$0xff]
        %v375 = vld [vmem:[%s241 + $0xf0] sm:$0xff]
        %v376 = vld [vmem:[%s241 + $0xf8] sm:$0xff]
        %s377 = scalar_lea.vmem %s241, 256 [#allocation7]
        %v378 = vld [vmem:[%s377] sm:$0xff]
        %v379 = vld [vmem:[%s377 + $0x8] sm:$0xff]
        %v380 = vld [vmem:[%s377 + $0x10] sm:$0xff]
        %v381 = vld [vmem:[%s377 + $0x18] sm:$0xff]
        %v382 = vld [vmem:[%s377 + $0x20] sm:$0xff]
        %v383 = vld [vmem:[%s377 + $0x28] sm:$0xff]
        %v384 = vld [vmem:[%s377 + $0x30] sm:$0xff]
        %v385 = vld [vmem:[%s377 + $0x38] sm:$0xff]
        %v386 = vld [vmem:[%s377 + $0x40] sm:$0xff]
        %v387 = vld [vmem:[%s377 + $0x48] sm:$0xff]
        %v388 = vld [vmem:[%s377 + $0x50] sm:$0xff]
        %v389 = vld [vmem:[%s377 + $0x58] sm:$0xff]
        %v390 = vld [vmem:[%s377 + $0x60] sm:$0xff]
        %v391 = vld [vmem:[%s377 + $0x68] sm:$0xff]
        %v392 = vld [vmem:[%s377 + $0x70] sm:$0xff]
        %v393 = vld [vmem:[%s377 + $0x78] sm:$0xff]
        %v394 = vld [vmem:[%s377 + $0x80] sm:$0xff]
        %v395 = vld [vmem:[%s377 + $0x88] sm:$0xff]
        %v396 = vld [vmem:[%s377 + $0x90] sm:$0xff]
        %v397 = vld [vmem:[%s377 + $0x98] sm:$0xff]
        %v398 = vld [vmem:[%s377 + $0xa0] sm:$0xff]
        %v399 = vld [vmem:[%s377 + $0xa8] sm:$0xff]
        %v400 = vld [vmem:[%s377 + $0xb0] sm:$0xff]
        %v401 = vld [vmem:[%s377 + $0xb8] sm:$0xff]
        %v402 = vld [vmem:[%s377 + $0xc0] sm:$0xff]
        %v403 = vld [vmem:[%s377 + $0xc8] sm:$0xff]
        %v404 = vld [vmem:[%s377 + $0xd0] sm:$0xff]
        %v405 = vld [vmem:[%s377 + $0xd8] sm:$0xff]
        %v406 = vld [vmem:[%s377 + $0xe0] sm:$0xff]
        %v407 = vld [vmem:[%s377 + $0xe8] sm:$0xff]
        %v408 = vld [vmem:[%s377 + $0xf0] sm:$0xff]
        %v409 = vld [vmem:[%s377 + $0xf8] sm:$0xff]
        %v442 = vunpack.c.l.b16 %v378
        %v443 = vunpack.c.h.b16 %v378
        %v444 = vunpack.c.l.b16 %v379
        %v445 = vunpack.c.h.b16 %v379
        %v446 = vunpack.c.l.b16 %v380
        %v447 = vunpack.c.h.b16 %v380
        %v448 = vunpack.c.l.b16 %v381
        %v449 = vunpack.c.h.b16 %v381
        %v450 = vunpack.c.l.b16 %v382
        %v451 = vunpack.c.h.b16 %v382
        %v452 = vunpack.c.l.b16 %v383
        %v453 = vunpack.c.h.b16 %v383
        %v454 = vunpack.c.l.b16 %v384
        %v455 = vunpack.c.h.b16 %v384
        %v456 = vunpack.c.l.b16 %v385
        %v457 = vunpack.c.h.b16 %v385
        %v458 = vunpack.c.l.b16 %v386
        %v459 = vunpack.c.h.b16 %v386
        %v460 = vunpack.c.l.b16 %v387
        %v461 = vunpack.c.h.b16 %v387
        %v462 = vunpack.c.l.b16 %v388
        %v463 = vunpack.c.h.b16 %v388
        %v464 = vunpack.c.l.b16 %v389
        %v465 = vunpack.c.h.b16 %v389
        %v466 = vunpack.c.l.b16 %v390
        %v467 = vunpack.c.h.b16 %v390
        %v468 = vunpack.c.l.b16 %v391
        %v469 = vunpack.c.h.b16 %v391
        %v470 = vunpack.c.l.b16 %v392
        %v471 = vunpack.c.h.b16 %v392
        %v472 = vunpack.c.l.b16 %v393
        %v473 = vunpack.c.h.b16 %v393
        %v474 = vunpack.c.l.b16 %v394
        %v475 = vunpack.c.h.b16 %v394
        %v476 = vunpack.c.l.b16 %v395
        %v477 = vunpack.c.h.b16 %v395
        %v478 = vunpack.c.l.b16 %v396
        %v479 = vunpack.c.h.b16 %v396
        %v480 = vunpack.c.l.b16 %v397
        %v481 = vunpack.c.h.b16 %v397
        %v482 = vunpack.c.l.b16 %v398
        %v483 = vunpack.c.h.b16 %v398
        %v484 = vunpack.c.l.b16 %v399
        %v485 = vunpack.c.h.b16 %v399
        %v486 = vunpack.c.l.b16 %v400
        %v487 = vunpack.c.h.b16 %v400
        %v488 = vunpack.c.l.b16 %v401
        %v489 = vunpack.c.h.b16 %v401
        %v490 = vunpack.c.l.b16 %v402
        %v491 = vunpack.c.h.b16 %v402
        %v492 = vunpack.c.l.b16 %v403
        %v493 = vunpack.c.h.b16 %v403
        %v494 = vunpack.c.l.b16 %v404
        %v495 = vunpack.c.h.b16 %v404
        %v496 = vunpack.c.l.b16 %v405
        %v497 = vunpack.c.h.b16 %v405
        %v498 = vunpack.c.l.b16 %v406
        %v499 = vunpack.c.h.b16 %v406
        %v500 = vunpack.c.l.b16 %v407
        %v501 = vunpack.c.h.b16 %v407
        %v502 = vunpack.c.l.b16 %v408
        %v503 = vunpack.c.h.b16 %v408
        %v504 = vunpack.c.l.b16 %v409
        %v505 = vunpack.c.h.b16 %v409
        %v506 = vpack.c.b16 %v446, %v442
        %v507 = vpack.c.b16 %v447, %v443
        %v508 = vpack.c.b16 %v448, %v444
        %v509 = vpack.c.b16 %v449, %v445
        %v510 = vpack.c.b16 %v454, %v450
        %v511 = vpack.c.b16 %v455, %v451
        %v512 = vpack.c.b16 %v456, %v452
        %v513 = vpack.c.b16 %v457, %v453
        %v514 = vpack.c.b16 %v462, %v458
        %v515 = vpack.c.b16 %v463, %v459
        %v516 = vpack.c.b16 %v464, %v460
        %v517 = vpack.c.b16 %v465, %v461
        %v518 = vpack.c.b16 %v470, %v466
        %v519 = vpack.c.b16 %v471, %v467
        %v520 = vpack.c.b16 %v472, %v468
        %v521 = vpack.c.b16 %v473, %v469
        %v522 = vpack.c.b16 %v478, %v474
        %v523 = vpack.c.b16 %v479, %v475
        %v524 = vpack.c.b16 %v480, %v476
        %v525 = vpack.c.b16 %v481, %v477
        %v526 = vpack.c.b16 %v486, %v482
        %v527 = vpack.c.b16 %v487, %v483
        %v528 = vpack.c.b16 %v488, %v484
        %v529 = vpack.c.b16 %v489, %v485
        %v530 = vpack.c.b16 %v494, %v490
        %v531 = vpack.c.b16 %v495, %v491
        %v532 = vpack.c.b16 %v496, %v492
        %v533 = vpack.c.b16 %v497, %v493
        %v534 = vpack.c.b16 %v502, %v498
        %v535 = vpack.c.b16 %v503, %v499
        %v536 = vpack.c.b16 %v504, %v500
        %v537 = vpack.c.b16 %v505, %v501
        %570 = vmatprep.subr.bf16.mxu0 %v507
        %571 = vmatpush1.bf16.msra.mxu0 %v506
        %572 = vmatprep.subr.bf16.mxu0 %v511
        %573 = vmatpush1.bf16.msra.mxu0 %v510
        %574 = vmatprep.subr.bf16.mxu0 %v515
        %575 = vmatpush1.bf16.msra.mxu0 %v514
        %576 = vmatprep.subr.bf16.mxu0 %v519
        %577 = vmatpush1.bf16.msra.mxu0 %v518
        %578 = vmatprep.subr.bf16.mxu0 %v523
        %579 = vmatpush1.bf16.msra.mxu0 %v522
        %580 = vmatprep.subr.bf16.mxu0 %v527
        %581 = vmatpush1.bf16.msra.mxu0 %v526
        %582 = vmatprep.subr.bf16.mxu0 %v531
        %583 = vmatpush1.bf16.msra.mxu0 %v530
        %584 = vmatprep.subr.bf16.mxu0 %v535
        %585 = vmatpush1.bf16.msra.mxu0 %v534
        %586 = vmatprep.subr.bf16.mxu0 0
        %587 = vmatpush1.bf16.msra.mxu0 0
        %588 = vmatprep.subr.bf16.mxu0 0
        %589 = vmatpush1.bf16.msra.mxu0 0
        %590 = vmatprep.subr.bf16.mxu0 0
        %591 = vmatpush1.bf16.msra.mxu0 0
        %592 = vmatprep.subr.bf16.mxu0 0
        %593 = vmatpush1.bf16.msra.mxu0 0
        %594 = vmatprep.subr.bf16.mxu0 0
        %595 = vmatpush1.bf16.msra.mxu0 0
        %596 = vmatprep.subr.bf16.mxu0 0
        %597 = vmatpush1.bf16.msra.mxu0 0
        %598 = vmatprep.subr.bf16.mxu0 0
        %599 = vmatpush1.bf16.msra.mxu0 0
        %600 = vmatprep.subr.bf16.mxu0 0
        %601 = vmatpush1.bf16.msra.mxu0 0
        %602 = vmatprep.mubr.bf16.mxu0 0
        %603 = vmatmul.mubr.bf16.gmra.mrb[0].mxu0 %v344
        %v604 = vpop.f32.mrb[0].mxu0
        %v605 = vadd.f32 0.0, %v604
        %v606 = vpop.f32.mrb[0].mxu0
        %v607 = vadd.f32 0.0, %v606
        %v608 = vpop.f32.mrb[0].mxu0
        %v609 = vpop.f32.mrb[0].mxu0
        %610 = vdwg.mxu0
        %611 = vmatprep.subr.bf16.mxu0 %v509
        %612 = vmatpush1.bf16.msra.mxu0 %v508
        %613 = vmatprep.subr.bf16.mxu0 %v513
        %614 = vmatpush1.bf16.msra.mxu0 %v512
        %615 = vmatprep.subr.bf16.mxu0 %v517
        %616 = vmatpush1.bf16.msra.mxu0 %v516
        %617 = vmatprep.subr.bf16.mxu0 %v521
        %618 = vmatpush1.bf16.msra.mxu0 %v520
        %619 = vmatprep.subr.bf16.mxu0 %v525
        %620 = vmatpush1.bf16.msra.mxu0 %v524
        %621 = vmatprep.subr.bf16.mxu0 %v529
        %622 = vmatpush1.bf16.msra.mxu0 %v528
        %623 = vmatprep.subr.bf16.mxu0 %v533
        %624 = vmatpush1.bf16.msra.mxu0 %v532
        %625 = vmatprep.subr.bf16.mxu0 %v537
        %626 = vmatpush1.bf16.msra.mxu0 %v536
        %627 = vmatprep.subr.bf16.mxu0 0
        %628 = vmatpush1.bf16.msra.mxu0 0
        %629 = vmatprep.subr.bf16.mxu0 0
        %630 = vmatpush1.bf16.msra.mxu0 0
        %631 = vmatprep.subr.bf16.mxu0 0
        %632 = vmatpush1.bf16.msra.mxu0 0
        %633 = vmatprep.subr.bf16.mxu0 0
        %634 = vmatpush1.bf16.msra.mxu0 0
        %635 = vmatprep.subr.bf16.mxu0 0
        %636 = vmatpush1.bf16.msra.mxu0 0
        %637 = vmatprep.subr.bf16.mxu0 0
        %638 = vmatpush1.bf16.msra.mxu0 0
        %639 = vmatprep.subr.bf16.mxu0 0
        %640 = vmatpush1.bf16.msra.mxu0 0
        %641 = vmatprep.subr.bf16.mxu0 0
        %642 = vmatpush1.bf16.msra.mxu0 0
        %643 = vmatprep.mubr.bf16.mxu0 0
        %644 = vmatmul.mubr.bf16.gmra.mrb[0].mxu0 %v344
        %v645 = vpop.f32.mrb[0].mxu0
        %v646 = vadd.f32 0.0, %v645
        %v647 = vpop.f32.mrb[0].mxu0
        %v648 = vadd.f32 0.0, %v647
        %v649 = vpop.f32.mrb[0].mxu0
        %v650 = vpop.f32.mrb[0].mxu0
        %651 = vdwg.mxu0
        %v684 = vunpack.c.l.b16 %v345
        %v685 = vunpack.c.h.b16 %v345
        %v686 = vunpack.c.l.b16 %v346
        %v687 = vunpack.c.h.b16 %v346
        %v688 = vunpack.c.l.b16 %v347
        %v689 = vunpack.c.h.b16 %v347
        %v690 = vunpack.c.l.b16 %v348
        %v691 = vunpack.c.h.b16 %v348
        %v692 = vunpack.c.l.b16 %v349
        %v693 = vunpack.c.h.b16 %v349
        %v694 = vunpack.c.l.b16 %v350
        %v695 = vunpack.c.h.b16 %v350
        %v696 = vunpack.c.l.b16 %v351
        %v697 = vunpack.c.h.b16 %v351
        %v698 = vunpack.c.l.b16 %v352
        %v699 = vunpack.c.h.b16 %v352
        %v700 = vunpack.c.l.b16 %v353
        %v701 = vunpack.c.h.b16 %v353
        %v702 = vunpack.c.l.b16 %v354
        %v703 = vunpack.c.h.b16 %v354
        %v704 = vunpack.c.l.b16 %v355
        %v705 = vunpack.c.h.b16 %v355
        %v706 = vunpack.c.l.b16 %v356
        %v707 = vunpack.c.h.b16 %v356
        %v708 = vunpack.c.l.b16 %v357
        %v709 = vunpack.c.h.b16 %v357
        %v710 = vunpack.c.l.b16 %v358
        %v711 = vunpack.c.h.b16 %v358
        %v712 = vunpack.c.l.b16 %v359
        %v713 = vunpack.c.h.b16 %v359
        %v714 = vunpack.c.l.b16 %v360
        %v715 = vunpack.c.h.b16 %v360
        %v716 = vunpack.c.l.b16 %v361
        %v717 = vunpack.c.h.b16 %v361
        %v718 = vunpack.c.l.b16 %v362
        %v719 = vunpack.c.h.b16 %v362
        %v720 = vunpack.c.l.b16 %v363
        %v721 = vunpack.c.h.b16 %v363
        %v722 = vunpack.c.l.b16 %v364
        %v723 = vunpack.c.h.b16 %v364
        %v724 = vunpack.c.l.b16 %v365
        %v725 = vunpack.c.h.b16 %v365
        %v726 = vunpack.c.l.b16 %v366
        %v727 = vunpack.c.h.b16 %v366
        %v728 = vunpack.c.l.b16 %v367
        %v729 = vunpack.c.h.b16 %v367
        %v730 = vunpack.c.l.b16 %v368
        %v731 = vunpack.c.h.b16 %v368
        %v732 = vunpack.c.l.b16 %v369
        %v733 = vunpack.c.h.b16 %v369
        %v734 = vunpack.c.l.b16 %v370
        %v735 = vunpack.c.h.b16 %v370
        %v736 = vunpack.c.l.b16 %v371
        %v737 = vunpack.c.h.b16 %v371
        %v738 = vunpack.c.l.b16 %v372
        %v739 = vunpack.c.h.b16 %v372
        %v740 = vunpack.c.l.b16 %v373
        %v741 = vunpack.c.h.b16 %v373
        %v742 = vunpack.c.l.b16 %v374
        %v743 = vunpack.c.h.b16 %v374
        %v744 = vunpack.c.l.b16 %v375
        %v745 = vunpack.c.h.b16 %v375
        %v746 = vunpack.c.l.b16 %v376
        %v747 = vunpack.c.h.b16 %v376
        %v748 = vpack.c.b16 %v688, %v684
        %v749 = vpack.c.b16 %v689, %v685
        %v750 = vpack.c.b16 %v690, %v686
        %v751 = vpack.c.b16 %v691, %v687
        %v752 = vpack.c.b16 %v696, %v692
        %v753 = vpack.c.b16 %v697, %v693
        %v754 = vpack.c.b16 %v698, %v694
        %v755 = vpack.c.b16 %v699, %v695
        %v756 = vpack.c.b16 %v704, %v700
        %v757 = vpack.c.b16 %v705, %v701
        %v758 = vpack.c.b16 %v706, %v702
        %v759 = vpack.c.b16 %v707, %v703
        %v760 = vpack.c.b16 %v712, %v708
        %v761 = vpack.c.b16 %v713, %v709
        %v762 = vpack.c.b16 %v714, %v710
        %v763 = vpack.c.b16 %v715, %v711
        %v764 = vpack.c.b16 %v720, %v716
        %v765 = vpack.c.b16 %v721, %v717
        %v766 = vpack.c.b16 %v722, %v718
        %v767 = vpack.c.b16 %v723, %v719
        %v768 = vpack.c.b16 %v728, %v724
        %v769 = vpack.c.b16 %v729, %v725
        %v770 = vpack.c.b16 %v730, %v726
        %v771 = vpack.c.b16 %v731, %v727
        %v772 = vpack.c.b16 %v736, %v732
        %v773 = vpack.c.b16 %v737, %v733
        %v774 = vpack.c.b16 %v738, %v734
        %v775 = vpack.c.b16 %v739, %v735
        %v776 = vpack.c.b16 %v744, %v740
        %v777 = vpack.c.b16 %v745, %v741
        %v778 = vpack.c.b16 %v746, %v742
        %v779 = vpack.c.b16 %v747, %v743
        %812 = vmatprep.subr.bf16.mxu0 %v749
        %813 = vmatpush1.bf16.msra.mxu0 %v748
        %814 = vmatprep.subr.bf16.mxu0 %v753
        %815 = vmatpush1.bf16.msra.mxu0 %v752
        %816 = vmatprep.subr.bf16.mxu0 %v757
        %817 = vmatpush1.bf16.msra.mxu0 %v756
        %818 = vmatprep.subr.bf16.mxu0 %v761
        %819 = vmatpush1.bf16.msra.mxu0 %v760
        %820 = vmatprep.subr.bf16.mxu0 %v765
        %821 = vmatpush1.bf16.msra.mxu0 %v764
        %822 = vmatprep.subr.bf16.mxu0 %v769
        %823 = vmatpush1.bf16.msra.mxu0 %v768
        %824 = vmatprep.subr.bf16.mxu0 %v773
        %825 = vmatpush1.bf16.msra.mxu0 %v772
        %826 = vmatprep.subr.bf16.mxu0 %v777
        %827 = vmatpush1.bf16.msra.mxu0 %v776
        %828 = vmatprep.subr.bf16.mxu0 0
        %829 = vmatpush1.bf16.msra.mxu0 0
        %830 = vmatprep.subr.bf16.mxu0 0
        %831 = vmatpush1.bf16.msra.mxu0 0
        %832 = vmatprep.subr.bf16.mxu0 0
        %833 = vmatpush1.bf16.msra.mxu0 0
        %834 = vmatprep.subr.bf16.mxu0 0
        %835 = vmatpush1.bf16.msra.mxu0 0
        %836 = vmatprep.subr.bf16.mxu0 0
        %837 = vmatpush1.bf16.msra.mxu0 0
        %838 = vmatprep.subr.bf16.mxu0 0
        %839 = vmatpush1.bf16.msra.mxu0 0
        %840 = vmatprep.subr.bf16.mxu0 0
        %841 = vmatpush1.bf16.msra.mxu0 0
        %842 = vmatprep.subr.bf16.mxu0 0
        %843 = vmatpush1.bf16.msra.mxu0 0
        %844 = vmatprep.mubr.bf16.mxu0 0
        %845 = vmatmul.mubr.bf16.gmra.mrb[0].mxu0 %v343
        %v846 = vpop.f32.mrb[0].mxu0
        %v847 = vadd.f32 %v605, %v846
        %v848 = vpop.f32.mrb[0].mxu0
        %v849 = vadd.f32 %v607, %v848
        %v850 = vpop.f32.mrb[0].mxu0
        %v851 = vpop.f32.mrb[0].mxu0
        %852 = vdwg.mxu0
        %853 = vmatprep.subr.bf16.mxu0 %v751
        %854 = vmatpush1.bf16.msra.mxu0 %v750
        %855 = vmatprep.subr.bf16.mxu0 %v755
        %856 = vmatpush1.bf16.msra.mxu0 %v754
        %857 = vmatprep.subr.bf16.mxu0 %v759
        %858 = vmatpush1.bf16.msra.mxu0 %v758
        %859 = vmatprep.subr.bf16.mxu0 %v763
        %860 = vmatpush1.bf16.msra.mxu0 %v762
        %861 = vmatprep.subr.bf16.mxu0 %v767
        %862 = vmatpush1.bf16.msra.mxu0 %v766
        %863 = vmatprep.subr.bf16.mxu0 %v771
        %864 = vmatpush1.bf16.msra.mxu0 %v770
        %865 = vmatprep.subr.bf16.mxu0 %v775
        %866 = vmatpush1.bf16.msra.mxu0 %v774
        %867 = vmatprep.subr.bf16.mxu0 %v779
        %868 = vmatpush1.bf16.msra.mxu0 %v778
        %869 = vmatprep.subr.bf16.mxu0 0
        %870 = vmatpush1.bf16.msra.mxu0 0
        %871 = vmatprep.subr.bf16.mxu0 0
        %872 = vmatpush1.bf16.msra.mxu0 0
        %873 = vmatprep.subr.bf16.mxu0 0
        %874 = vmatpush1.bf16.msra.mxu0 0
        %875 = vmatprep.subr.bf16.mxu0 0
        %876 = vmatpush1.bf16.msra.mxu0 0
        %877 = vmatprep.subr.bf16.mxu0 0
        %878 = vmatpush1.bf16.msra.mxu0 0
        %879 = vmatprep.subr.bf16.mxu0 0
        %880 = vmatpush1.bf16.msra.mxu0 0
        %881 = vmatprep.subr.bf16.mxu0 0
        %882 = vmatpush1.bf16.msra.mxu0 0
        %883 = vmatprep.subr.bf16.mxu0 0
        %884 = vmatpush1.bf16.msra.mxu0 0
        %885 = vmatprep.mubr.bf16.mxu0 0
        %886 = vmatmul.mubr.bf16.gmra.mrb[0].mxu0 %v343
        %v887 = vpop.f32.mrb[0].mxu0
        %v888 = vadd.f32 %v646, %v887
        %v889 = vpop.f32.mrb[0].mxu0
        %v890 = vadd.f32 %v648, %v889
        %v891 = vpop.f32.mrb[0].mxu0
        %v892 = vpop.f32.mrb[0].mxu0
        %893 = vdwg.mxu0
        %v894 = vld [vmem:[%s250] sm:$0xf]
        %v896 = vlaneseq
        %v897 = vshrl.u32 %v896, 7
        %v898 = vsub.s32 0, %v897
        %v899 = vrot.slane %v894, %v898
        %v900 = vlaneseq
        %v901 = vshrl.u32 %v900, 7
        %v902 = vsub.s32 1, %v901
        %v903 = vrot.slane %v894, %v902
        %v904 = vlaneseq
        %v905 = vshrl.u32 %v904, 7
        %v906 = vsub.s32 2, %v905
        %v907 = vrot.slane %v894, %v906
        %v908 = vlaneseq
        %v909 = vshrl.u32 %v908, 7
        %v910 = vsub.s32 3, %v909
        %v911 = vrot.slane %v894, %v910
        %v916 = vadd.f32 %v847, %v899
        %v917 = vadd.f32 %v849, %v903
        %v918 = vadd.f32 %v888, %v907
        %v919 = vadd.f32 %v890, %v911
        %v920 = vmul.f32 %v916, %v331
        %v921 = vmul.f32 %v917, %v331
        %v922 = vmul.f32 %v918, %v331
        %v923 = vmul.f32 %v919, %v331
        %v924 = vadd.f32 %v920, %v306
        %v925 = vadd.f32 %v921, %v306
        %v926 = vadd.f32 %v922, %v306
        %v927 = vadd.f32 %v923, %v306
        %v932 = vcombine.low %v924, %v925
        %v933 = vcombine.low %v926, %v927
        %v935 = vunpack.c.l.s4 1983009808
        %v936 = vunpack.c.0.s8 %v935
        %v937 = vlaneseq
        %v938 = vshrl.u32 %v937, 7
        %v939 = vsub.s32 %v936, %v938
        %v940 = vrot.slane %v932, %v939
        %v942 = vunpack.c.l.s4 1983009808
        %v943 = vunpack.c.0.s8 %v942
        %v944 = vlaneseq
        %v945 = vshrl.u32 %v944, 7
        %v946 = vsub.s32 %v943, %v945
        %v947 = vrot.slane %v933, %v946
        %v948 = vcombine.low %v940, %v947
        %950 = vst [vmem:[%s279] sm:$0xff] %v948
        %s951 = scalar_lea.vmem %s241, 512 [#allocation7]
        %v952 = vld [vmem:[%s951] sm:$0xff]
        %v953 = vld [vmem:[%s951 + $0x8] sm:$0xff]
        %v954 = vld [vmem:[%s951 + $0x10] sm:$0xff]
        %v955 = vld [vmem:[%s951 + $0x18] sm:$0xff]
        %v956 = vld [vmem:[%s951 + $0x20] sm:$0xff]
        %v957 = vld [vmem:[%s951 + $0x28] sm:$0xff]
        %v958 = vld [vmem:[%s951 + $0x30] sm:$0xff]
        %v959 = vld [vmem:[%s951 + $0x38] sm:$0xff]
        %v960 = vld [vmem:[%s951 + $0x40] sm:$0xff]
        %v961 = vld [vmem:[%s951 + $0x48] sm:$0xff]
        %v962 = vld [vmem:[%s951 + $0x50] sm:$0xff]
        %v963 = vld [vmem:[%s951 + $0x58] sm:$0xff]
        %v964 = vld [vmem:[%s951 + $0x60] sm:$0xff]
        %v965 = vld [vmem:[%s951 + $0x68] sm:$0xff]
        %v966 = vld [vmem:[%s951 + $0x70] sm:$0xff]
        %v967 = vld [vmem:[%s951 + $0x78] sm:$0xff]
        %v968 = vld [vmem:[%s951 + $0x80] sm:$0xff]
        %v969 = vld [vmem:[%s951 + $0x88] sm:$0xff]
        %v970 = vld [vmem:[%s951 + $0x90] sm:$0xff]
        %v971 = vld [vmem:[%s951 + $0x98] sm:$0xff]
        %v972 = vld [vmem:[%s951 + $0xa0] sm:$0xff]
        %v973 = vld [vmem:[%s951 + $0xa8] sm:$0xff]
        %v974 = vld [vmem:[%s951 + $0xb0] sm:$0xff]
        %v975 = vld [vmem:[%s951 + $0xb8] sm:$0xff]
        %v976 = vld [vmem:[%s951 + $0xc0] sm:$0xff]
        %v977 = vld [vmem:[%s951 + $0xc8] sm:$0xff]
        %v978 = vld [vmem:[%s951 + $0xd0] sm:$0xff]
        %v979 = vld [vmem:[%s951 + $0xd8] sm:$0xff]
        %v980 = vld [vmem:[%s951 + $0xe0] sm:$0xff]
        %v981 = vld [vmem:[%s951 + $0xe8] sm:$0xff]
        %v982 = vld [vmem:[%s951 + $0xf0] sm:$0xff]
        %v983 = vld [vmem:[%s951 + $0xf8] sm:$0xff]
        %s984 = scalar_lea.vmem %s241, 768 [#allocation7]
        %v985 = vld [vmem:[%s984] sm:$0xff]
        %v986 = vld [vmem:[%s984 + $0x8] sm:$0xff]
        %v987 = vld [vmem:[%s984 + $0x10] sm:$0xff]
        %v988 = vld [vmem:[%s984 + $0x18] sm:$0xff]
        %v989 = vld [vmem:[%s984 + $0x20] sm:$0xff]
        %v990 = vld [vmem:[%s984 + $0x28] sm:$0xff]
        %v991 = vld [vmem:[%s984 + $0x30] sm:$0xff]
        %v992 = vld [vmem:[%s984 + $0x38] sm:$0xff]
        %v993 = vld [vmem:[%s984 + $0x40] sm:$0xff]
        %v994 = vld [vmem:[%s984 + $0x48] sm:$0xff]
        %v995 = vld [vmem:[%s984 + $0x50] sm:$0xff]
        %v996 = vld [vmem:[%s984 + $0x58] sm:$0xff]
        %v997 = vld [vmem:[%s984 + $0x60] sm:$0xff]
        %v998 = vld [vmem:[%s984 + $0x68] sm:$0xff]
        %v999 = vld [vmem:[%s984 + $0x70] sm:$0xff]
        %v1000 = vld [vmem:[%s984 + $0x78] sm:$0xff]
        %v1001 = vld [vmem:[%s984 + $0x80] sm:$0xff]
        %v1002 = vld [vmem:[%s984 + $0x88] sm:$0xff]
        %v1003 = vld [vmem:[%s984 + $0x90] sm:$0xff]
        %v1004 = vld [vmem:[%s984 + $0x98] sm:$0xff]
        %v1005 = vld [vmem:[%s984 + $0xa0] sm:$0xff]
        %v1006 = vld [vmem:[%s984 + $0xa8] sm:$0xff]
        %v1007 = vld [vmem:[%s984 + $0xb0] sm:$0xff]
        %v1008 = vld [vmem:[%s984 + $0xb8] sm:$0xff]
        %v1009 = vld [vmem:[%s984 + $0xc0] sm:$0xff]
        %v1010 = vld [vmem:[%s984 + $0xc8] sm:$0xff]
        %v1011 = vld [vmem:[%s984 + $0xd0] sm:$0xff]
        %v1012 = vld [vmem:[%s984 + $0xd8] sm:$0xff]
        %v1013 = vld [vmem:[%s984 + $0xe0] sm:$0xff]
        %v1014 = vld [vmem:[%s984 + $0xe8] sm:$0xff]
        %v1015 = vld [vmem:[%s984 + $0xf0] sm:$0xff]
        %v1016 = vld [vmem:[%s984 + $0xf8] sm:$0xff]
        %v1049 = vunpack.c.l.b16 %v985
        %v1050 = vunpack.c.h.b16 %v985
        %v1051 = vunpack.c.l.b16 %v986
        %v1052 = vunpack.c.h.b16 %v986
        %v1053 = vunpack.c.l.b16 %v987
        %v1054 = vunpack.c.h.b16 %v987
        %v1055 = vunpack.c.l.b16 %v988
        %v1056 = vunpack.c.h.b16 %v988
        %v1057 = vunpack.c.l.b16 %v989
        %v1058 = vunpack.c.h.b16 %v989
        %v1059 = vunpack.c.l.b16 %v990
        %v1060 = vunpack.c.h.b16 %v990
        %v1061 = vunpack.c.l.b16 %v991
        %v1062 = vunpack.c.h.b16 %v991
        %v1063 = vunpack.c.l.b16 %v992
        %v1064 = vunpack.c.h.b16 %v992
        %v1065 = vunpack.c.l.b16 %v993
        %v1066 = vunpack.c.h.b16 %v993
        %v1067 = vunpack.c.l.b16 %v994
        %v1068 = vunpack.c.h.b16 %v994
        %v1069 = vunpack.c.l.b16 %v995
        %v1070 = vunpack.c.h.b16 %v995
        %v1071 = vunpack.c.l.b16 %v996
        %v1072 = vunpack.c.h.b16 %v996
        %v1073 = vunpack.c.l.b16 %v997
        %v1074 = vunpack.c.h.b16 %v997
        %v1075 = vunpack.c.l.b16 %v998
        %v1076 = vunpack.c.h.b16 %v998
        %v1077 = vunpack.c.l.b16 %v999
        %v1078 = vunpack.c.h.b16 %v999
        %v1079 = vunpack.c.l.b16 %v1000
        %v1080 = vunpack.c.h.b16 %v1000
        %v1081 = vunpack.c.l.b16 %v1001
        %v1082 = vunpack.c.h.b16 %v1001
        %v1083 = vunpack.c.l.b16 %v1002
        %v1084 = vunpack.c.h.b16 %v1002
        %v1085 = vunpack.c.l.b16 %v1003
        %v1086 = vunpack.c.h.b16 %v1003
        %v1087 = vunpack.c.l.b16 %v1004
        %v1088 = vunpack.c.h.b16 %v1004
        %v1089 = vunpack.c.l.b16 %v1005
        %v1090 = vunpack.c.h.b16 %v1005
        %v1091 = vunpack.c.l.b16 %v1006
        %v1092 = vunpack.c.h.b16 %v1006
        %v1093 = vunpack.c.l.b16 %v1007
        %v1094 = vunpack.c.h.b16 %v1007
        %v1095 = vunpack.c.l.b16 %v1008
        %v1096 = vunpack.c.h.b16 %v1008
        %v1097 = vunpack.c.l.b16 %v1009
        %v1098 = vunpack.c.h.b16 %v1009
        %v1099 = vunpack.c.l.b16 %v1010
        %v1100 = vunpack.c.h.b16 %v1010
        %v1101 = vunpack.c.l.b16 %v1011
        %v1102 = vunpack.c.h.b16 %v1011
        %v1103 = vunpack.c.l.b16 %v1012
        %v1104 = vunpack.c.h.b16 %v1012
        %v1105 = vunpack.c.l.b16 %v1013
        %v1106 = vunpack.c.h.b16 %v1013
        %v1107 = vunpack.c.l.b16 %v1014
        %v1108 = vunpack.c.h.b16 %v1014
        %v1109 = vunpack.c.l.b16 %v1015
        %v1110 = vunpack.c.h.b16 %v1015
        %v1111 = vunpack.c.l.b16 %v1016
        %v1112 = vunpack.c.h.b16 %v1016
        %v1113 = vpack.c.b16 %v1053, %v1049
        %v1114 = vpack.c.b16 %v1054, %v1050
        %v1115 = vpack.c.b16 %v1055, %v1051
        %v1116 = vpack.c.b16 %v1056, %v1052
        %v1117 = vpack.c.b16 %v1061, %v1057
        %v1118 = vpack.c.b16 %v1062, %v1058
        %v1119 = vpack.c.b16 %v1063, %v1059
        %v1120 = vpack.c.b16 %v1064, %v1060
        %v1121 = vpack.c.b16 %v1069, %v1065
        %v1122 = vpack.c.b16 %v1070, %v1066
        %v1123 = vpack.c.b16 %v1071, %v1067
        %v1124 = vpack.c.b16 %v1072, %v1068
        %v1125 = vpack.c.b16 %v1077, %v1073
        %v1126 = vpack.c.b16 %v1078, %v1074
        %v1127 = vpack.c.b16 %v1079, %v1075
        %v1128 = vpack.c.b16 %v1080, %v1076
        %v1129 = vpack.c.b16 %v1085, %v1081
        %v1130 = vpack.c.b16 %v1086, %v1082
        %v1131 = vpack.c.b16 %v1087, %v1083
        %v1132 = vpack.c.b16 %v1088, %v1084
        %v1133 = vpack.c.b16 %v1093, %v1089
        %v1134 = vpack.c.b16 %v1094, %v1090
        %v1135 = vpack.c.b16 %v1095, %v1091
        %v1136 = vpack.c.b16 %v1096, %v1092
        %v1137 = vpack.c.b16 %v1101, %v1097
        %v1138 = vpack.c.b16 %v1102, %v1098
        %v1139 = vpack.c.b16 %v1103, %v1099
        %v1140 = vpack.c.b16 %v1104, %v1100
        %v1141 = vpack.c.b16 %v1109, %v1105
        %v1142 = vpack.c.b16 %v1110, %v1106
        %v1143 = vpack.c.b16 %v1111, %v1107
        %v1144 = vpack.c.b16 %v1112, %v1108
        %1177 = vmatprep.subr.bf16.mxu0 %v1114
        %1178 = vmatpush1.bf16.msra.mxu0 %v1113
        %1179 = vmatprep.subr.bf16.mxu0 %v1118
        %1180 = vmatpush1.bf16.msra.mxu0 %v1117
        %1181 = vmatprep.subr.bf16.mxu0 %v1122
        %1182 = vmatpush1.bf16.msra.mxu0 %v1121
        %1183 = vmatprep.subr.bf16.mxu0 %v1126
        %1184 = vmatpush1.bf16.msra.mxu0 %v1125
        %1185 = vmatprep.subr.bf16.mxu0 %v1130
        %1186 = vmatpush1.bf16.msra.mxu0 %v1129
        %1187 = vmatprep.subr.bf16.mxu0 %v1134
        %1188 = vmatpush1.bf16.msra.mxu0 %v1133
        %1189 = vmatprep.subr.bf16.mxu0 %v1138
        %1190 = vmatpush1.bf16.msra.mxu0 %v1137
        %1191 = vmatprep.subr.bf16.mxu0 %v1142
        %1192 = vmatpush1.bf16.msra.mxu0 %v1141
        %1193 = vmatprep.subr.bf16.mxu0 0
        %1194 = vmatpush1.bf16.msra.mxu0 0
        %1195 = vmatprep.subr.bf16.mxu0 0
        %1196 = vmatpush1.bf16.msra.mxu0 0
        %1197 = vmatprep.subr.bf16.mxu0 0
        %1198 = vmatpush1.bf16.msra.mxu0 0
        %1199 = vmatprep.subr.bf16.mxu0 0
        %1200 = vmatpush1.bf16.msra.mxu0 0
        %1201 = vmatprep.subr.bf16.mxu0 0
        %1202 = vmatpush1.bf16.msra.mxu0 0
        %1203 = vmatprep.subr.bf16.mxu0 0
        %1204 = vmatpush1.bf16.msra.mxu0 0
        %1205 = vmatprep.subr.bf16.mxu0 0
        %1206 = vmatpush1.bf16.msra.mxu0 0
        %1207 = vmatprep.subr.bf16.mxu0 0
        %1208 = vmatpush1.bf16.msra.mxu0 0
        %1209 = vmatprep.mubr.bf16.mxu0 0
        %1210 = vmatmul.mubr.bf16.gmra.mrb[0].mxu0 %v344
        %v1211 = vpop.f32.mrb[0].mxu0
        %v1212 = vadd.f32 0.0, %v1211
        %v1213 = vpop.f32.mrb[0].mxu0
        %v1214 = vadd.f32 0.0, %v1213
        %v1215 = vpop.f32.mrb[0].mxu0
        %v1216 = vpop.f32.mrb[0].mxu0
        %1217 = vdwg.mxu0
        %1218 = vmatprep.subr.bf16.mxu0 %v1116
        %1219 = vmatpush1.bf16.msra.mxu0 %v1115
        %1220 = vmatprep.subr.bf16.mxu0 %v1120
        %1221 = vmatpush1.bf16.msra.mxu0 %v1119
        %1222 = vmatprep.subr.bf16.mxu0 %v1124
        %1223 = vmatpush1.bf16.msra.mxu0 %v1123
        %1224 = vmatprep.subr.bf16.mxu0 %v1128
        %1225 = vmatpush1.bf16.msra.mxu0 %v1127
        %1226 = vmatprep.subr.bf16.mxu0 %v1132
        %1227 = vmatpush1.bf16.msra.mxu0 %v1131
        %1228 = vmatprep.subr.bf16.mxu0 %v1136
        %1229 = vmatpush1.bf16.msra.mxu0 %v1135
        %1230 = vmatprep.subr.bf16.mxu0 %v1140
        %1231 = vmatpush1.bf16.msra.mxu0 %v1139
        %1232 = vmatprep.subr.bf16.mxu0 %v1144
        %1233 = vmatpush1.bf16.msra.mxu0 %v1143
        %1234 = vmatprep.subr.bf16.mxu0 0
        %1235 = vmatpush1.bf16.msra.mxu0 0
        %1236 = vmatprep.subr.bf16.mxu0 0
        %1237 = vmatpush1.bf16.msra.mxu0 0
        %1238 = vmatprep.subr.bf16.mxu0 0
        %1239 = vmatpush1.bf16.msra.mxu0 0
        %1240 = vmatprep.subr.bf16.mxu0 0
        %1241 = vmatpush1.bf16.msra.mxu0 0
        %1242 = vmatprep.subr.bf16.mxu0 0
        %1243 = vmatpush1.bf16.msra.mxu0 0
        %1244 = vmatprep.subr.bf16.mxu0 0
        %1245 = vmatpush1.bf16.msra.mxu0 0
        %1246 = vmatprep.subr.bf16.mxu0 0
        %1247 = vmatpush1.bf16.msra.mxu0 0
        %1248 = vmatprep.subr.bf16.mxu0 0
        %1249 = vmatpush1.bf16.msra.mxu0 0
        %1250 = vmatprep.mubr.bf16.mxu0 0
        %1251 = vmatmul.mubr.bf16.gmra.mrb[0].mxu0 %v344
        %v1252 = vpop.f32.mrb[0].mxu0
        %v1253 = vadd.f32 0.0, %v1252
        %v1254 = vpop.f32.mrb[0].mxu0
        %v1255 = vadd.f32 0.0, %v1254
        %v1256 = vpop.f32.mrb[0].mxu0
        %v1257 = vpop.f32.mrb[0].mxu0
        %1258 = vdwg.mxu0
        %v1291 = vunpack.c.l.b16 %v952
        %v1292 = vunpack.c.h.b16 %v952
        %v1293 = vunpack.c.l.b16 %v953
        %v1294 = vunpack.c.h.b16 %v953
        %v1295 = vunpack.c.l.b16 %v954
        %v1296 = vunpack.c.h.b16 %v954
        %v1297 = vunpack.c.l.b16 %v955
        %v1298 = vunpack.c.h.b16 %v955
        %v1299 = vunpack.c.l.b16 %v956
        %v1300 = vunpack.c.h.b16 %v956
        %v1301 = vunpack.c.l.b16 %v957
        %v1302 = vunpack.c.h.b16 %v957
        %v1303 = vunpack.c.l.b16 %v958
        %v1304 = vunpack.c.h.b16 %v958
        %v1305 = vunpack.c.l.b16 %v959
        %v1306 = vunpack.c.h.b16 %v959
        %v1307 = vunpack.c.l.b16 %v960
        %v1308 = vunpack.c.h.b16 %v960
        %v1309 = vunpack.c.l.b16 %v961
        %v1310 = vunpack.c.h.b16 %v961
        %v1311 = vunpack.c.l.b16 %v962
        %v1312 = vunpack.c.h.b16 %v962
        %v1313 = vunpack.c.l.b16 %v963
        %v1314 = vunpack.c.h.b16 %v963
        %v1315 = vunpack.c.l.b16 %v964
        %v1316 = vunpack.c.h.b16 %v964
        %v1317 = vunpack.c.l.b16 %v965
        %v1318 = vunpack.c.h.b16 %v965
        %v1319 = vunpack.c.l.b16 %v966
        %v1320 = vunpack.c.h.b16 %v966
        %v1321 = vunpack.c.l.b16 %v967
        %v1322 = vunpack.c.h.b16 %v967
        %v1323 = vunpack.c.l.b16 %v968
        %v1324 = vunpack.c.h.b16 %v968
        %v1325 = vunpack.c.l.b16 %v969
        %v1326 = vunpack.c.h.b16 %v969
        %v1327 = vunpack.c.l.b16 %v970
        %v1328 = vunpack.c.h.b16 %v970
        %v1329 = vunpack.c.l.b16 %v971
        %v1330 = vunpack.c.h.b16 %v971
        %v1331 = vunpack.c.l.b16 %v972
        %v1332 = vunpack.c.h.b16 %v972
        %v1333 = vunpack.c.l.b16 %v973
        %v1334 = vunpack.c.h.b16 %v973
        %v1335 = vunpack.c.l.b16 %v974
        %v1336 = vunpack.c.h.b16 %v974
        %v1337 = vunpack.c.l.b16 %v975
        %v1338 = vunpack.c.h.b16 %v975
        %v1339 = vunpack.c.l.b16 %v976
        %v1340 = vunpack.c.h.b16 %v976
        %v1341 = vunpack.c.l.b16 %v977
        %v1342 = vunpack.c.h.b16 %v977
        %v1343 = vunpack.c.l.b16 %v978
        %v1344 = vunpack.c.h.b16 %v978
        %v1345 = vunpack.c.l.b16 %v979
        %v1346 = vunpack.c.h.b16 %v979
        %v1347 = vunpack.c.l.b16 %v980
        %v1348 = vunpack.c.h.b16 %v980
        %v1349 = vunpack.c.l.b16 %v981
        %v1350 = vunpack.c.h.b16 %v981
        %v1351 = vunpack.c.l.b16 %v982
        %v1352 = vunpack.c.h.b16 %v982
        %v1353 = vunpack.c.l.b16 %v983
        %v1354 = vunpack.c.h.b16 %v983
        %v1355 = vpack.c.b16 %v1295, %v1291
        %v1356 = vpack.c.b16 %v1296, %v1292
        %v1357 = vpack.c.b16 %v1297, %v1293
        %v1358 = vpack.c.b16 %v1298, %v1294
        %v1359 = vpack.c.b16 %v1303, %v1299
        %v1360 = vpack.c.b16 %v1304, %v1300
        %v1361 = vpack.c.b16 %v1305, %v1301
        %v1362 = vpack.c.b16 %v1306, %v1302
        %v1363 = vpack.c.b16 %v1311, %v1307
        %v1364 = vpack.c.b16 %v1312, %v1308
        %v1365 = vpack.c.b16 %v1313, %v1309
        %v1366 = vpack.c.b16 %v1314, %v1310
        %v1367 = vpack.c.b16 %v1319, %v1315
        %v1368 = vpack.c.b16 %v1320, %v1316
        %v1369 = vpack.c.b16 %v1321, %v1317
        %v1370 = vpack.c.b16 %v1322, %v1318
        %v1371 = vpack.c.b16 %v1327, %v1323
        %v1372 = vpack.c.b16 %v1328, %v1324
        %v1373 = vpack.c.b16 %v1329, %v1325
        %v1374 = vpack.c.b16 %v1330, %v1326
        %v1375 = vpack.c.b16 %v1335, %v1331
        %v1376 = vpack.c.b16 %v1336, %v1332
        %v1377 = vpack.c.b16 %v1337, %v1333
        %v1378 = vpack.c.b16 %v1338, %v1334
        %v1379 = vpack.c.b16 %v1343, %v1339
        %v1380 = vpack.c.b16 %v1344, %v1340
        %v1381 = vpack.c.b16 %v1345, %v1341
        %v1382 = vpack.c.b16 %v1346, %v1342
        %v1383 = vpack.c.b16 %v1351, %v1347
        %v1384 = vpack.c.b16 %v1352, %v1348
        %v1385 = vpack.c.b16 %v1353, %v1349
        %v1386 = vpack.c.b16 %v1354, %v1350
        %1419 = vmatprep.subr.bf16.mxu0 %v1356
        %1420 = vmatpush1.bf16.msra.mxu0 %v1355
        %1421 = vmatprep.subr.bf16.mxu0 %v1360
        %1422 = vmatpush1.bf16.msra.mxu0 %v1359
        %1423 = vmatprep.subr.bf16.mxu0 %v1364
        %1424 = vmatpush1.bf16.msra.mxu0 %v1363
        %1425 = vmatprep.subr.bf16.mxu0 %v1368
        %1426 = vmatpush1.bf16.msra.mxu0 %v1367
        %1427 = vmatprep.subr.bf16.mxu0 %v1372
        %1428 = vmatpush1.bf16.msra.mxu0 %v1371
        %1429 = vmatprep.subr.bf16.mxu0 %v1376
        %1430 = vmatpush1.bf16.msra.mxu0 %v1375
        %1431 = vmatprep.subr.bf16.mxu0 %v1380
        %1432 = vmatpush1.bf16.msra.mxu0 %v1379
        %1433 = vmatprep.subr.bf16.mxu0 %v1384
        %1434 = vmatpush1.bf16.msra.mxu0 %v1383
        %1435 = vmatprep.subr.bf16.mxu0 0
        %1436 = vmatpush1.bf16.msra.mxu0 0
        %1437 = vmatprep.subr.bf16.mxu0 0
        %1438 = vmatpush1.bf16.msra.mxu0 0
        %1439 = vmatprep.subr.bf16.mxu0 0
        %1440 = vmatpush1.bf16.msra.mxu0 0
        %1441 = vmatprep.subr.bf16.mxu0 0
        %1442 = vmatpush1.bf16.msra.mxu0 0
        %1443 = vmatprep.subr.bf16.mxu0 0
        %1444 = vmatpush1.bf16.msra.mxu0 0
        %1445 = vmatprep.subr.bf16.mxu0 0
        %1446 = vmatpush1.bf16.msra.mxu0 0
        %1447 = vmatprep.subr.bf16.mxu0 0
        %1448 = vmatpush1.bf16.msra.mxu0 0
        %1449 = vmatprep.subr.bf16.mxu0 0
        %1450 = vmatpush1.bf16.msra.mxu0 0
        %1451 = vmatprep.mubr.bf16.mxu0 0
        %1452 = vmatmul.mubr.bf16.gmra.mrb[0].mxu0 %v343
        %v1453 = vpop.f32.mrb[0].mxu0
        %v1454 = vadd.f32 %v1212, %v1453
        %v1455 = vpop.f32.mrb[0].mxu0
        %v1456 = vadd.f32 %v1214, %v1455
        %v1457 = vpop.f32.mrb[0].mxu0
        %v1458 = vpop.f32.mrb[0].mxu0
        %1459 = vdwg.mxu0
        %1460 = vmatprep.subr.bf16.mxu0 %v1358
        %1461 = vmatpush1.bf16.msra.mxu0 %v1357
        %1462 = vmatprep.subr.bf16.mxu0 %v1362
        %1463 = vmatpush1.bf16.msra.mxu0 %v1361
        %1464 = vmatprep.subr.bf16.mxu0 %v1366
        %1465 = vmatpush1.bf16.msra.mxu0 %v1365
        %1466 = vmatprep.subr.bf16.mxu0 %v1370
        %1467 = vmatpush1.bf16.msra.mxu0 %v1369
        %1468 = vmatprep.subr.bf16.mxu0 %v1374
        %1469 = vmatpush1.bf16.msra.mxu0 %v1373
        %1470 = vmatprep.subr.bf16.mxu0 %v1378
        %1471 = vmatpush1.bf16.msra.mxu0 %v1377
        %1472 = vmatprep.subr.bf16.mxu0 %v1382
        %1473 = vmatpush1.bf16.msra.mxu0 %v1381
        %1474 = vmatprep.subr.bf16.mxu0 %v1386
        %1475 = vmatpush1.bf16.msra.mxu0 %v1385
        %1476 = vmatprep.subr.bf16.mxu0 0
        %1477 = vmatpush1.bf16.msra.mxu0 0
        %1478 = vmatprep.subr.bf16.mxu0 0
        %1479 = vmatpush1.bf16.msra.mxu0 0
        %1480 = vmatprep.subr.bf16.mxu0 0
        %1481 = vmatpush1.bf16.msra.mxu0 0
        %1482 = vmatprep.subr.bf16.mxu0 0
        %1483 = vmatpush1.bf16.msra.mxu0 0
        %1484 = vmatprep.subr.bf16.mxu0 0
        %1485 = vmatpush1.bf16.msra.mxu0 0
        %1486 = vmatprep.subr.bf16.mxu0 0
        %1487 = vmatpush1.bf16.msra.mxu0 0
        %1488 = vmatprep.subr.bf16.mxu0 0
        %1489 = vmatpush1.bf16.msra.mxu0 0
        %1490 = vmatprep.subr.bf16.mxu0 0
        %1491 = vmatpush1.bf16.msra.mxu0 0
        %1492 = vmatprep.mubr.bf16.mxu0 0
        %1493 = vmatmul.mubr.bf16.gmra.mrb[0].mxu0 %v343
        %v1494 = vpop.f32.mrb[0].mxu0
        %v1495 = vadd.f32 %v1253, %v1494
        %v1496 = vpop.f32.mrb[0].mxu0
        %v1497 = vadd.f32 %v1255, %v1496
        %v1498 = vpop.f32.mrb[0].mxu0
        %v1499 = vpop.f32.mrb[0].mxu0
        %1500 = vdwg.mxu0
        %s1501 = scalar_lea.vmem %s250, 4 [#allocation8]
        %v1502 = vld [vmem:[%s1501] sm:$0xf]
        %v1504 = vlaneseq
        %v1505 = vshrl.u32 %v1504, 7
        %v1506 = vsub.s32 0, %v1505
        %v1507 = vrot.slane %v1502, %v1506
        %v1508 = vlaneseq
        %v1509 = vshrl.u32 %v1508, 7
        %v1510 = vsub.s32 1, %v1509
        %v1511 = vrot.slane %v1502, %v1510
        %v1512 = vlaneseq
        %v1513 = vshrl.u32 %v1512, 7
        %v1514 = vsub.s32 2, %v1513
        %v1515 = vrot.slane %v1502, %v1514
        %v1516 = vlaneseq
        %v1517 = vshrl.u32 %v1516, 7
        %v1518 = vsub.s32 3, %v1517
        %v1519 = vrot.slane %v1502, %v1518
        %v1524 = vadd.f32 %v1454, %v1507
        %v1525 = vadd.f32 %v1456, %v1511
        %v1526 = vadd.f32 %v1495, %v1515
        %v1527 = vadd.f32 %v1497, %v1519
        %v1528 = vmul.f32 %v1524, %v338
        %v1529 = vmul.f32 %v1525, %v338
        %v1530 = vmul.f32 %v1526, %v338
        %v1531 = vmul.f32 %v1527, %v338
        %v1532 = vadd.f32 %v1528, %v308
        %v1533 = vadd.f32 %v1529, %v308
        %v1534 = vadd.f32 %v1530, %v308
        %v1535 = vadd.f32 %v1531, %v308
        %v1540 = vcombine.low %v1532, %v1533
        %v1541 = vcombine.low %v1534, %v1535
        %v1543 = vunpack.c.l.s4 1983009808
        %v1544 = vunpack.c.0.s8 %v1543
        %v1545 = vlaneseq
        %v1546 = vshrl.u32 %v1545, 7
        %v1547 = vsub.s32 %v1544, %v1546
        %v1548 = vrot.slane %v1540, %v1547
        %v1550 = vunpack.c.l.s4 1983009808
        %v1551 = vunpack.c.0.s8 %v1550
        %v1552 = vlaneseq
        %v1553 = vshrl.u32 %v1552, 7
        %v1554 = vsub.s32 %v1551, %v1553
        %v1555 = vrot.slane %v1541, %v1554
        %v1556 = vcombine.low %v1548, %v1555
        %s1558 = scalar_lea.vmem %s279, 8 [#allocation9]
        %1559 = vst [vmem:[%s1558] sm:$0xff] %v1556
        %s1560 = sand.u32 %s122, 1
        %s1561 = scalar_lea.sflag [#allocation4], %s1560
        %s1562 = sand.u32 %s122, 1
        %s1563 = smul.addr %s1562, 16
        %s1564 = scalar_lea.vmem [#allocation9], %s1563
        // Predicated region
        $region53: #{tpu_custom_call.1} parent=35 // pred_check
          %p1565 = pneg %p132
        $region54: #{tpu_custom_call.1} parent=35 // pred_check_branch
          %1567 = sbr.rel (%p1565) target = $region56
        $region55: #{tpu_custom_call.1} parent=35 // pred_region
          %s1568 = smul.u32 4, %s20
          %s1570 = ssub.s32 256, 256
          %1571 = vsyncadd %s1561, %s1570
          %s1572 = smul.addr %s1568, 32
          %s1573 = scalar_lea.hbm %s4, %s1572
          %s1574 = sshll.u32 %s1564, 4
          %s1575 = int_to_ptr.vmem [resolvable:$true] %s1574
          %1580 = dma.vmem_to_hbm [thread:$0]  %s1575, 256, %s1573, %s1561, 128, 256, 8
        $region56: #{tpu_custom_call.1} parent=35 // pred_fallthru
          _
      $region36: #{tpu_custom_call.1} parent=5 // pred_fallthru
        _
      %p1581 = scmp.le.s32.totalorder 2, %s15
      // Predicated region
      $region57: #{tpu_custom_call.1} parent=5 // pred_check
        %p1582 = pneg %p1581
      $region58: #{tpu_custom_call.1} parent=5 // pred_check_branch
        %1584 = sbr.rel (%p1582) target = $region60
      $region59: #{tpu_custom_call.1} parent=5 // pred_region
        %s1585 = ssub.s32 %s15, 2
        // Predicated region
        $region61: #{tpu_custom_call.1} parent=59 // pred_check
          %p1586 = pneg %p138
        $region62: #{tpu_custom_call.1} parent=59 // pred_check_branch
          %1588 = sbr.rel (%p1586) target = $region64
        $region63: #{tpu_custom_call.1} parent=59 // pred_region
          %s1589 = sand.u32 %s123, 1
          %s1590 = scalar_lea.sflag [#allocation4], %s1589
          %s1591 = sand.u32 %s123, 1
          %s1592 = smul.addr %s1591, 16
          %s1593 = scalar_lea.vmem [#allocation9], %s1592
          %1594 = dma.done %s1590, 256
        $region64: #{tpu_custom_call.1} parent=59 // pred_fallthru
          _
      $region60: #{tpu_custom_call.1} parent=5 // pred_fallthru
        _
    $region6: #{tpu_custom_call.1} parent=1 // loop_footer
      %s19 = sadd.s32 1, %s15
    $region7: #{tpu_custom_call.1} parent=1 // loop_footer_branch
      %14 = sbr.rel target = $region3
    $region8: #{tpu_custom_call.1} parent=1 // loop_exit
      _
    %1595 = vsyncpa [#allocation3], 1
    %s1596 = scalar_lea.sflag [#allocation3], 1
    %1597 = vsyncpa %s1596, 1
    %1598 = vsyncpa [#allocation6], 1
    %1599 = vsyncpa [#allocation4], 1
    %s1600 = scalar_lea.sflag [#allocation4], 1
    %1601 = vsyncpa %s1600, 1

</llo_original>
